<compile_context>
chip_gen: v7x
topology: tpu7x:2x2x1
jax: 0.10.0
libtpu: 0.0.40
codegen_flags: <defaults>
</compile_context>

<pallas_src>
import math
from functools import partial

import jax
import jax.numpy as jnp
from jax.experimental import pallas as pl
from jax.experimental.pallas import tpu as pltpu


# ----------------------------------------------------------------------------
# Fused QKV-projection + multi-head attention + output-projection kernel
# ----------------------------------------------------------------------------
def _fused_attention_kernel(xb_ref, xq_ref, wq_ref, bq_ref, wkv_ref, bkv_ref,
                            wo_ref, bo_ref, o_ref,
                            k_scr, v_scr, q_scr, o_scr, *, n_heads):
    qi = pl.program_id(1)
    L, E = xb_ref.shape[1], xb_ref.shape[2]
    tq = xq_ref.shape[1]
    H = n_heads
    Dh = E // H
    cd = k_scr.dtype

    # ---- K/V projection: once per batch, written head-major into VMEM scratch.
    @pl.when(qi == 0)
    def _project_kv():
        kv = jnp.dot(xb_ref[0], wkv_ref[...],
                     preferred_element_type=jnp.float32) + bkv_ref[...]        # (L, 2E)
        for h in range(H):                      # direct sliced stores (no concat)
            k_scr[h] = kv[:, h * Dh:(h + 1) * Dh].astype(cd)
            v_scr[h] = kv[:, E + h * Dh:E + (h + 1) * Dh].astype(cd)

    # ---- Q projection for this query tile (1/sqrt(Dh) pre-folded into wq/bq).
    qf = jnp.dot(xq_ref[0], wq_ref[...],
                 preferred_element_type=jnp.float32) + bq_ref[...]             # (tq, E)
    for h in range(H):
        q_scr[h] = qf[:, h * Dh:(h + 1) * Dh].astype(cd)

    # ---- Batched-head attention core (one MXU dot per stage, heads batched).
    q = q_scr[...]                                                             # (H, tq, Dh)
    k = k_scr[...]                                                             # (H, L, Dh)
    v = v_scr[...]                                                             # (H, L, Dh)
    s = jnp.einsum("hqd,hkd->hqk", q, k,
                   preferred_element_type=jnp.float32)                         # (H, tq, L)
    s = s - jnp.max(s, axis=-1, keepdims=True)
    p = jnp.exp(s)
    denom = jnp.sum(p, axis=-1, keepdims=True)
    p = p * pl.reciprocal(denom, approx=True)          # EUP slot, overlaps MXU
    o = jnp.einsum("hqk,hkd->hqd", p.astype(cd), v,
                   preferred_element_type=jnp.float32)                         # (H, tq, Dh)

    # ---- Merge heads by direct sliced stores, then fused output projection.
    for h in range(H):
        o_scr[:, h * Dh:(h + 1) * Dh] = o[h].astype(cd)
    out = jnp.dot(o_scr[...], wo_ref[...],
                  preferred_element_type=jnp.float32) + bo_ref[...]            # (tq, E)
    o_ref[0] = out.astype(o_ref.dtype)


def _pick_tq(L, preferred=256):
    """Query-tile length: largest divisor of L among sublane-aligned candidates,
    else the full extent (always legal since it equals the array dim)."""
    if L <= preferred:
        return L
    for cand in (preferred, 128, 64, 32, 16, 8):
        if L % cand == 0:
            return cand
    return L


def _vmem_limit_bytes():
    """Generation-aware scoped-VMEM budget."""
    cap = None
    try:
        cap = int(getattr(pltpu.get_tpu_info(), "vmem_capacity_bytes", 0)) or None
    except Exception:
        cap = None
    if cap is None:
        return 48 * 1024 * 1024                    # unknown: known-safe value
    if cap <= 64 * 1024 * 1024:                    # v7x-class (64 MiB physical)
        return 40 * 1024 * 1024
    return 64 * 1024 * 1024                        # v5e / v6e (128 MiB physical)


def fused_attention(xb, wq_t, bq, wkv_t, bkv, wo_t, bo, n_heads, out_dtype):
    """xb: (N, L, E) batch-major input -> (N, L, E) attention output."""
    N, L, E = xb.shape
    H = n_heads
    assert E % H == 0
    Dh = E // H
    tq = _pick_tq(L)
    grid = (N, L // tq)
    cd = xb.dtype
    vmem_limit = _vmem_limit_bytes()

    # Rough resident-VMEM estimate: x block + q tile (double-buffered), K/V/Q
    # scratch, resident weights (double-buffered), f32 scores/probs/temporaries.
    itemsize = jnp.dtype(cd).itemsize
    resident = (itemsize * (2 * L * E + 2 * tq * E + 2 * H * L * Dh
                            + H * tq * Dh + tq * E + 8 * E * E)
                + 4 * (3 * H * tq * L + 6 * tq * E))
    assert resident < vmem_limit, (
        f"Fused-attention VMEM working set (~{resident >> 20} MiB) exceeds the "
        f"budget ({vmem_limit >> 20} MiB) for L={L}, E={E}. "
        "TODO(synk): flash-style streaming of K/V tiles from HBM.")

    flops = N * (2 * L * E * 3 * E + 4 * L * L * E + 2 * L * E * E)

    return pl.pallas_call(
        partial(_fused_attention_kernel, n_heads=H),
        grid_spec=pltpu.PrefetchScalarGridSpec(
            num_scalar_prefetch=0,
            grid=grid,
            in_specs=[
                pl.BlockSpec((1, L, E), lambda n, qi: (n, 0, 0)),    # per-batch x (K/V source), resident over qi
                pl.BlockSpec((1, tq, E), lambda n, qi: (n, qi, 0)),  # query tile
                pl.BlockSpec((E, E), lambda n, qi: (0, 0)),          # W_q^T   (VMEM-resident)
                pl.BlockSpec((1, E), lambda n, qi: (0, 0)),          # b_q
                pl.BlockSpec((E, 2 * E), lambda n, qi: (0, 0)),      # W_kv^T  (VMEM-resident)
                pl.BlockSpec((1, 2 * E), lambda n, qi: (0, 0)),      # b_kv
                pl.BlockSpec((E, E), lambda n, qi: (0, 0)),          # W_o^T   (VMEM-resident)
                pl.BlockSpec((1, E), lambda n, qi: (0, 0)),          # b_o
            ],
            out_specs=pl.BlockSpec((1, tq, E), lambda n, qi: (n, qi, 0)),
            scratch_shapes=[
                pltpu.VMEM((H, L, Dh), cd),     # K, head-major (persists across qi)
                pltpu.VMEM((H, L, Dh), cd),     # V, head-major
                pltpu.VMEM((H, tq, Dh), cd),    # Q, head-major
                pltpu.VMEM((tq, E), cd),        # merged-head attention output
            ],
        ),
        out_shape=jax.ShapeDtypeStruct((N, L, E), out_dtype),
        compiler_params=pltpu.CompilerParams(
            dimension_semantics=("parallel", "arbitrary"),
            vmem_limit_bytes=vmem_limit,
        ),
        cost_estimate=pl.CostEstimate(
            flops=flops,
            transcendentals=N * H * L * L,
            bytes_accessed=itemsize * (2 * N * L * E + 6 * E * E) + 4 * N * L * E,
        ),
    )(xb, xb, wq_t, bq, wkv_t, bkv, wo_t, bo)


# ----------------------------------------------------------------------------
# Host-side weight composition (outer Linear ∘ in_proj, scale folded into q)
# ----------------------------------------------------------------------------
def _compose_params(params, E, n_heads):
    Dh = E // n_heads
    scale = 1.0 / math.sqrt(Dh)
    w_in, b_in = params["in_proj_w"], params["in_proj_b"]

    def comp(w_outer, b_outer, w_i, b_i):
        # y = (x @ w_outer.T + b_outer) @ w_i.T + b_i
        #   =  x @ (w_i @ w_outer).T + (w_i @ b_outer + b_i)
        return w_i @ w_outer, w_i @ b_outer + b_i

    wq_e, bq_e = comp(params["wq"], params["bq"], w_in[:E], b_in[:E])
    wk_e, bk_e = comp(params["wk"], params["bk"], w_in[E:2 * E], b_in[E:2 * E])
    wv_e, bv_e = comp(params["wv"], params["bv"], w_in[2 * E:], b_in[2 * E:])

    # Fold the 1/sqrt(Dh) attention scale into the q projection (free).
    wq_e = wq_e * scale
    bq_e = bq_e * scale

    wq_t = wq_e.T                                                  # (E, E)
    wkv_t = jnp.concatenate([wk_e, wv_e], axis=0).T                # (E, 2E)
    bq = bq_e.reshape(1, E).astype(jnp.float32)
    bkv = jnp.concatenate([bk_e, bv_e], axis=0).reshape(1, 2 * E).astype(jnp.float32)
    wo_t = params["wo"].T                                          # (E, E)
    bo = params["bo"].reshape(1, E).astype(jnp.float32)
    return wq_t, bq, wkv_t, bkv, wo_t, bo


# ----------------------------------------------------------------------------
# Module forward
# ----------------------------------------------------------------------------
def attention_forward(x, params, n_heads, *, compute_dtype=None):
    """x: (L, N, E) -> (L, N, E).  compute_dtype=jnp.bfloat16 enables bf16 MXU
    operands (f32 accumulation) at reduced precision; default keeps x.dtype."""
    L, N, E = x.shape
    wq_t, bq, wkv_t, bkv, wo_t, bo = _compose_params(params, E, n_heads)

    cd = x.dtype if compute_dtype is None else jnp.dtype(compute_dtype)
    # Batch-major so per-batch attention blocks are contiguous / lane-dense.
    xb = jnp.transpose(x, (1, 0, 2)).astype(cd)                    # (N, L, E)
    if cd != jnp.float32:
        wq_t, wkv_t, wo_t = (w.astype(cd) for w in (wq_t, wkv_t, wo_t))

    out_b = fused_attention(xb, wq_t, bq, wkv_t, bkv, wo_t, bo, n_heads, x.dtype)
    return jnp.transpose(out_b, (1, 0, 2))                         # (L, N, E)


# Pure-JAX reference of the ORIGINAL (unfused) math, for a sanity check.
def attention_forward_ref(x, params, n_heads):
    L, N, E = x.shape
    Dh = E // n_heads
    x2d = x.reshape(L * N, E)

    def lin(t, w, b):
        return t @ w.T + b

    q = lin(x2d, params["wq"], params["bq"])
    k = lin(x2d, params["wk"], params["bk"])
    v = lin(x2d, params["wv"], params["bv"])
    w_in, b_in = params["in_proj_w"], params["in_proj_b"]
    q = lin(q, w_in[:E], b_in[:E])
    k = lin(k, w_in[E:2 * E], b_in[E:2 * E])
    v = lin(v, w_in[2 * E:], b_in[2 * E:])

    def to_heads(t):
        return t.reshape(L, N * n_heads, Dh).transpose(1, 0, 2)

    qh, kh, vh = to_heads(q), to_heads(k), to_heads(v)
    s = jnp.einsum("bld,bmd->blm", qh, kh) / math.sqrt(Dh)
    p = jax.nn.softmax(s, axis=-1)
    o = jnp.einsum("blm,bmd->bld", p, vh)
    out2d = o.transpose(1, 0, 2).reshape(L * N, E)
    return lin(out2d, params["wo"], params["bo"]).reshape(L, N, E)


# ----------------------------------------------------------------------------
# Deterministic parameter init + run
# ----------------------------------------------------------------------------
def init_params(key, dim):
    ks = jax.random.split(key, 10)
    s = 0.05
    return {
        "wq": s * jax.random.normal(ks[0], (dim, dim), jnp.float32),
        "bq": s * jax.random.normal(ks[1], (dim,), jnp.float32),
        "wk": s * jax.random.normal(ks[2], (dim, dim), jnp.float32),
        "bk": s * jax.random.normal(ks[3], (dim,), jnp.float32),
        "wv": s * jax.random.normal(ks[4], (dim, dim), jnp.float32),
        "bv": s * jax.random.normal(ks[5], (dim,), jnp.float32),
        "in_proj_w": s * jax.random.normal(ks[6], (3 * dim, dim), jnp.float32),
        "in_proj_b": s * jax.random.normal(ks[7], (3 * dim,), jnp.float32),
        "wo": s * jax.random.normal(ks[8], (dim, dim), jnp.float32),
        "bo": s * jax.random.normal(ks[9], (dim,), jnp.float32),
    }


if __name__ == "__main__":
    fwd = jax.jit(attention_forward, static_argnums=2)

    # Small config (matches the module spec: dim=32, n_heads=4, seq=8, batch=2).
    dim, n_heads, seq_len, batch = 32, 4, 8, 2
    kx, kp = jax.random.split(jax.random.PRNGKey(0))
    x = jax.random.normal(kx, (seq_len, batch, dim), jnp.float32)   # (L, N, E)
    params = init_params(kp, dim)

    out = jax.block_until_ready(fwd(x, params, n_heads))
    ref = attention_forward_ref(x, params, n_heads)
    assert out.shape == (seq_len, batch, dim)
    assert jnp.allclose(out, ref, atol=1e-3, rtol=1e-3), "mismatch vs reference (small)"

    # Larger config: multiple query tiles -> exercises K/V-scratch reuse across
    # the "arbitrary" grid axis and the resident-weight path.
    dim2, n_heads2, seq2, batch2 = 256, 4, 512, 2
    k2x, k2p = jax.random.split(jax.random.PRNGKey(1))
    x2 = jax.random.normal(k2x, (seq2, batch2, dim2), jnp.float32)
    params2 = init_params(k2p, dim2)
    out2 = jax.block_until_ready(fwd(x2, params2, n_heads2))
    ref2 = attention_forward_ref(x2, params2, n_heads2)
    assert out2.shape == (seq2, batch2, dim2)
    assert jnp.allclose(out2, ref2, atol=2e-3, rtol=2e-3), "mismatch vs reference (large)"

    print("KERNEL_OK")
</pallas_src>

<mosaic_0001>
module attributes {stable_mosaic.version = 11 : i64} {
  func.func @_fused_attention_kernel(%arg0: i32, %arg1: i32, %arg2: memref<1x8x32xf32, #tpu.memory_space<vmem>>, %arg3: memref<1x8x32xf32, #tpu.memory_space<vmem>>, %arg4: memref<32x32xf32, #tpu.memory_space<vmem>>, %arg5: memref<1x32xf32, #tpu.memory_space<vmem>>, %arg6: memref<32x64xf32, #tpu.memory_space<vmem>>, %arg7: memref<1x64xf32, #tpu.memory_space<vmem>>, %arg8: memref<32x32xf32, #tpu.memory_space<vmem>>, %arg9: memref<1x32xf32, #tpu.memory_space<vmem>>, %arg10: memref<1x8x32xf32, #tpu.memory_space<vmem>>, %arg11: memref<4x8x8xf32, #tpu.memory_space<vmem>>, %arg12: memref<4x8x8xf32, #tpu.memory_space<vmem>>, %arg13: memref<4x8x8xf32, #tpu.memory_space<vmem>>, %arg14: memref<8x32xf32, #tpu.memory_space<vmem>>) attributes {dimension_semantics = [#tpu.dimension_semantics<parallel>, #tpu.dimension_semantics<arbitrary>], iteration_bounds = array<i64: 2, 1>, scalar_prefetch = 0 : i64, scratch_operands = 4 : i64, tpu.core_type = #tpu.core_type<tc>, window_params = [{transform_indices = @transform_0, window_bounds = array<i64: 1, 8, 32>}, {transform_indices = @transform_1, window_bounds = array<i64: 1, 8, 32>}, {pipeline_mode = #tpu.pipeline_mode<synchronous>, transform_indices = @transform_2, window_bounds = array<i64: 32, 32>}, {pipeline_mode = #tpu.pipeline_mode<synchronous>, transform_indices = @transform_3, window_bounds = array<i64: 1, 32>}, {pipeline_mode = #tpu.pipeline_mode<synchronous>, transform_indices = @transform_4, window_bounds = array<i64: 32, 64>}, {pipeline_mode = #tpu.pipeline_mode<synchronous>, transform_indices = @transform_5, window_bounds = array<i64: 1, 64>}, {pipeline_mode = #tpu.pipeline_mode<synchronous>, transform_indices = @transform_6, window_bounds = array<i64: 32, 32>}, {pipeline_mode = #tpu.pipeline_mode<synchronous>, transform_indices = @transform_7, window_bounds = array<i64: 1, 32>}, {transform_indices = @transform_8, window_bounds = array<i64: 1, 8, 32>}]} {
    %c0_i32 = arith.constant 0 : i32
    %0 = arith.cmpi eq, %arg1, %c0_i32 : i32
    %1 = arith.extui %0 : i1 to i32
    %c0_i32_0 = arith.constant 0 : i32
    %2 = arith.cmpi ne, %1, %c0_i32_0 : i32
    scf.if %2 {
      %c0_44 = arith.constant 0 : index
      %c0_45 = arith.constant 0 : index
      %c0_46 = arith.constant 0 : index
      %62 = vector.load %arg2[%c0_44, %c0_45, %c0_46] : memref<1x8x32xf32, #tpu.memory_space<vmem>>, vector<1x8x32xf32>
      %63 = vector.shape_cast %62 : vector<1x8x32xf32> to vector<8x32xf32>
      %c0_47 = arith.constant 0 : index
      %c0_48 = arith.constant 0 : index
      %64 = vector.load %arg6[%c0_47, %c0_48] : memref<32x64xf32, #tpu.memory_space<vmem>>, vector<32x64xf32>
      %cst_49 = arith.constant dense<0.000000e+00> : vector<8x64xf32>
      %65 = tpu.matmul %63, %64, %cst_49 {dimension_numbers = #tpu.dot_dimension_numbers<[1], [0], [0], [1], [0, 0, 1, 1], [], []>} : vector<8x32xf32>, vector<32x64xf32>, vector<8x64xf32> -> vector<8x64xf32>
      %c0_50 = arith.constant 0 : index
      %c0_51 = arith.constant 0 : index
      %66 = vector.load %arg7[%c0_50, %c0_51] : memref<1x64xf32, #tpu.memory_space<vmem>>, vector<1x64xf32>
      %67 = vector.broadcast %66 : vector<1x64xf32> to vector<8x64xf32>
      %68 = arith.addf %65, %67 : vector<8x64xf32>
      %69 = vector.extract_strided_slice %68 {offsets = [0, 0], sizes = [8, 8], strides = [1, 1]} : vector<8x64xf32> to vector<8x8xf32>
      %c0_52 = arith.constant 0 : index
      %c0_53 = arith.constant 0 : index
      %c0_54 = arith.constant 0 : index
      %70 = vector.load %arg11[%c0_52, %c0_53, %c0_54] : memref<4x8x8xf32, #tpu.memory_space<vmem>>, vector<1x8x8xf32>
      %71 = vector.shape_cast %70 : vector<1x8x8xf32> to vector<8x8xf32>
      %72 = vector.shape_cast %69 : vector<8x8xf32> to vector<1x8x8xf32>
      tpu.vector_store %arg11[%c0_52, %c0_53, %c0_54], %72 {strides = array<i32>} : memref<4x8x8xf32, #tpu.memory_space<vmem>>, vector<1x8x8xf32>,
      %73 = vector.extract_strided_slice %68 {offsets = [0, 32], sizes = [8, 8], strides = [1, 1]} : vector<8x64xf32> to vector<8x8xf32>
      %c0_55 = arith.constant 0 : index
      %c0_56 = arith.constant 0 : index
      %c0_57 = arith.constant 0 : index
      %74 = vector.load %arg12[%c0_55, %c0_56, %c0_57] : memref<4x8x8xf32, #tpu.memory_space<vmem>>, vector<1x8x8xf32>
      %75 = vector.shape_cast %74 : vector<1x8x8xf32> to vector<8x8xf32>
      %76 = vector.shape_cast %73 : vector<8x8xf32> to vector<1x8x8xf32>
      tpu.vector_store %arg12[%c0_55, %c0_56, %c0_57], %76 {strides = array<i32>} : memref<4x8x8xf32, #tpu.memory_space<vmem>>, vector<1x8x8xf32>,
      %77 = vector.extract_strided_slice %68 {offsets = [0, 8], sizes = [8, 8], strides = [1, 1]} : vector<8x64xf32> to vector<8x8xf32>
      %c1_58 = arith.constant 1 : index
      %c0_59 = arith.constant 0 : index
      %c0_60 = arith.constant 0 : index
      %78 = vector.load %arg11[%c1_58, %c0_59, %c0_60] : memref<4x8x8xf32, #tpu.memory_space<vmem>>, vector<1x8x8xf32>
      %79 = vector.shape_cast %78 : vector<1x8x8xf32> to vector<8x8xf32>
      %80 = vector.shape_cast %77 : vector<8x8xf32> to vector<1x8x8xf32>
      tpu.vector_store %arg11[%c1_58, %c0_59, %c0_60], %80 {strides = array<i32>} : memref<4x8x8xf32, #tpu.memory_space<vmem>>, vector<1x8x8xf32>,
      %81 = vector.extract_strided_slice %68 {offsets = [0, 40], sizes = [8, 8], strides = [1, 1]} : vector<8x64xf32> to vector<8x8xf32>
      %c1_61 = arith.constant 1 : index
      %c0_62 = arith.constant 0 : index
      %c0_63 = arith.constant 0 : index
      %82 = vector.load %arg12[%c1_61, %c0_62, %c0_63] : memref<4x8x8xf32, #tpu.memory_space<vmem>>, vector<1x8x8xf32>
      %83 = vector.shape_cast %82 : vector<1x8x8xf32> to vector<8x8xf32>
      %84 = vector.shape_cast %81 : vector<8x8xf32> to vector<1x8x8xf32>
      tpu.vector_store %arg12[%c1_61, %c0_62, %c0_63], %84 {strides = array<i32>} : memref<4x8x8xf32, #tpu.memory_space<vmem>>, vector<1x8x8xf32>,
      %85 = vector.extract_strided_slice %68 {offsets = [0, 16], sizes = [8, 8], strides = [1, 1]} : vector<8x64xf32> to vector<8x8xf32>
      %c2_64 = arith.constant 2 : index
      %c0_65 = arith.constant 0 : index
      %c0_66 = arith.constant 0 : index
      %86 = vector.load %arg11[%c2_64, %c0_65, %c0_66] : memref<4x8x8xf32, #tpu.memory_space<vmem>>, vector<1x8x8xf32>
      %87 = vector.shape_cast %86 : vector<1x8x8xf32> to vector<8x8xf32>
      %88 = vector.shape_cast %85 : vector<8x8xf32> to vector<1x8x8xf32>
      tpu.vector_store %arg11[%c2_64, %c0_65, %c0_66], %88 {strides = array<i32>} : memref<4x8x8xf32, #tpu.memory_space<vmem>>, vector<1x8x8xf32>,
      %89 = vector.extract_strided_slice %68 {offsets = [0, 48], sizes = [8, 8], strides = [1, 1]} : vector<8x64xf32> to vector<8x8xf32>
      %c2_67 = arith.constant 2 : index
      %c0_68 = arith.constant 0 : index
      %c0_69 = arith.constant 0 : index
      %90 = vector.load %arg12[%c2_67, %c0_68, %c0_69] : memref<4x8x8xf32, #tpu.memory_space<vmem>>, vector<1x8x8xf32>
      %91 = vector.shape_cast %90 : vector<1x8x8xf32> to vector<8x8xf32>
      %92 = vector.shape_cast %89 : vector<8x8xf32> to vector<1x8x8xf32>
      tpu.vector_store %arg12[%c2_67, %c0_68, %c0_69], %92 {strides = array<i32>} : memref<4x8x8xf32, #tpu.memory_space<vmem>>, vector<1x8x8xf32>,
      %93 = vector.extract_strided_slice %68 {offsets = [0, 24], sizes = [8, 8], strides = [1, 1]} : vector<8x64xf32> to vector<8x8xf32>
      %c3_70 = arith.constant 3 : index
      %c0_71 = arith.constant 0 : index
      %c0_72 = arith.constant 0 : index
      %94 = vector.load %arg11[%c3_70, %c0_71, %c0_72] : memref<4x8x8xf32, #tpu.memory_space<vmem>>, vector<1x8x8xf32>
      %95 = vector.shape_cast %94 : vector<1x8x8xf32> to vector<8x8xf32>
      %96 = vector.shape_cast %93 : vector<8x8xf32> to vector<1x8x8xf32>
      tpu.vector_store %arg11[%c3_70, %c0_71, %c0_72], %96 {strides = array<i32>} : memref<4x8x8xf32, #tpu.memory_space<vmem>>, vector<1x8x8xf32>,
      %97 = vector.extract_strided_slice %68 {offsets = [0, 56], sizes = [8, 8], strides = [1, 1]} : vector<8x64xf32> to vector<8x8xf32>
      %c3_73 = arith.constant 3 : index
      %c0_74 = arith.constant 0 : index
      %c0_75 = arith.constant 0 : index
      %98 = vector.load %arg12[%c3_73, %c0_74, %c0_75] : memref<4x8x8xf32, #tpu.memory_space<vmem>>, vector<1x8x8xf32>
      %99 = vector.shape_cast %98 : vector<1x8x8xf32> to vector<8x8xf32>
      %100 = vector.shape_cast %97 : vector<8x8xf32> to vector<1x8x8xf32>
      tpu.vector_store %arg12[%c3_73, %c0_74, %c0_75], %100 {strides = array<i32>} : memref<4x8x8xf32, #tpu.memory_space<vmem>>, vector<1x8x8xf32>,
    } else {
    }
    %c0 = arith.constant 0 : index
    %c0_1 = arith.constant 0 : index
    %c0_2 = arith.constant 0 : index
    %3 = vector.load %arg3[%c0, %c0_1, %c0_2] : memref<1x8x32xf32, #tpu.memory_space<vmem>>, vector<1x8x32xf32>
    %4 = vector.shape_cast %3 : vector<1x8x32xf32> to vector<8x32xf32>
    %c0_3 = arith.constant 0 : index
    %c0_4 = arith.constant 0 : index
    %5 = vector.load %arg4[%c0_3, %c0_4] : memref<32x32xf32, #tpu.memory_space<vmem>>, vector<32x32xf32>
    %cst = arith.constant dense<0.000000e+00> : vector<8x32xf32>
    %6 = tpu.matmul %4, %5, %cst {dimension_numbers = #tpu.dot_dimension_numbers<[1], [0], [0], [1], [0, 0, 1, 1], [], []>} : vector<8x32xf32>, vector<32x32xf32>, vector<8x32xf32> -> vector<8x32xf32>
    %c0_5 = arith.constant 0 : index
    %c0_6 = arith.constant 0 : index
    %7 = vector.load %arg5[%c0_5, %c0_6] : memref<1x32xf32, #tpu.memory_space<vmem>>, vector<1x32xf32>
    %8 = vector.broadcast %7 : vector<1x32xf32> to vector<8x32xf32>
    %9 = arith.addf %6, %8 : vector<8x32xf32>
    %10 = vector.extract_strided_slice %9 {offsets = [0, 0], sizes = [8, 8], strides = [1, 1]} : vector<8x32xf32> to vector<8x8xf32>
    %c0_7 = arith.constant 0 : index
    %c0_8 = arith.constant 0 : index
    %c0_9 = arith.constant 0 : index
    %11 = vector.load %arg13[%c0_7, %c0_8, %c0_9] : memref<4x8x8xf32, #tpu.memory_space<vmem>>, vector<1x8x8xf32>
    %12 = vector.shape_cast %11 : vector<1x8x8xf32> to vector<8x8xf32>
    %13 = vector.shape_cast %10 : vector<8x8xf32> to vector<1x8x8xf32>
    tpu.vector_store %arg13[%c0_7, %c0_8, %c0_9], %13 {strides = array<i32>} : memref<4x8x8xf32, #tpu.memory_space<vmem>>, vector<1x8x8xf32>,
    %14 = vector.extract_strided_slice %9 {offsets = [0, 8], sizes = [8, 8], strides = [1, 1]} : vector<8x32xf32> to vector<8x8xf32>
    %c1 = arith.constant 1 : index
    %c0_10 = arith.constant 0 : index
    %c0_11 = arith.constant 0 : index
    %15 = vector.load %arg13[%c1, %c0_10, %c0_11] : memref<4x8x8xf32, #tpu.memory_space<vmem>>, vector<1x8x8xf32>
    %16 = vector.shape_cast %15 : vector<1x8x8xf32> to vector<8x8xf32>
    %17 = vector.shape_cast %14 : vector<8x8xf32> to vector<1x8x8xf32>
    tpu.vector_store %arg13[%c1, %c0_10, %c0_11], %17 {strides = array<i32>} : memref<4x8x8xf32, #tpu.memory_space<vmem>>, vector<1x8x8xf32>,
    %18 = vector.extract_strided_slice %9 {offsets = [0, 16], sizes = [8, 8], strides = [1, 1]} : vector<8x32xf32> to vector<8x8xf32>
    %c2 = arith.constant 2 : index
    %c0_12 = arith.constant 0 : index
    %c0_13 = arith.constant 0 : index
    %19 = vector.load %arg13[%c2, %c0_12, %c0_13] : memref<4x8x8xf32, #tpu.memory_space<vmem>>, vector<1x8x8xf32>
    %20 = vector.shape_cast %19 : vector<1x8x8xf32> to vector<8x8xf32>
    %21 = vector.shape_cast %18 : vector<8x8xf32> to vector<1x8x8xf32>
    tpu.vector_store %arg13[%c2, %c0_12, %c0_13], %21 {strides = array<i32>} : memref<4x8x8xf32, #tpu.memory_space<vmem>>, vector<1x8x8xf32>,
    %22 = vector.extract_strided_slice %9 {offsets = [0, 24], sizes = [8, 8], strides = [1, 1]} : vector<8x32xf32> to vector<8x8xf32>
    %c3 = arith.constant 3 : index
    %c0_14 = arith.constant 0 : index
    %c0_15 = arith.constant 0 : index
    %23 = vector.load %arg13[%c3, %c0_14, %c0_15] : memref<4x8x8xf32, #tpu.memory_space<vmem>>, vector<1x8x8xf32>
    %24 = vector.shape_cast %23 : vector<1x8x8xf32> to vector<8x8xf32>
    %25 = vector.shape_cast %22 : vector<8x8xf32> to vector<1x8x8xf32>
    tpu.vector_store %arg13[%c3, %c0_14, %c0_15], %25 {strides = array<i32>} : memref<4x8x8xf32, #tpu.memory_space<vmem>>, vector<1x8x8xf32>,
    %c0_16 = arith.constant 0 : index
    %c0_17 = arith.constant 0 : index
    %c0_18 = arith.constant 0 : index
    %26 = vector.load %arg13[%c0_16, %c0_17, %c0_18] : memref<4x8x8xf32, #tpu.memory_space<vmem>>, vector<4x8x8xf32>
    %c0_19 = arith.constant 0 : index
    %c0_20 = arith.constant 0 : index
    %c0_21 = arith.constant 0 : index
    %27 = vector.load %arg11[%c0_19, %c0_20, %c0_21] : memref<4x8x8xf32, #tpu.memory_space<vmem>>, vector<4x8x8xf32>
    %c0_22 = arith.constant 0 : index
    %c0_23 = arith.constant 0 : index
    %c0_24 = arith.constant 0 : index
    %28 = vector.load %arg12[%c0_22, %c0_23, %c0_24] : memref<4x8x8xf32, #tpu.memory_space<vmem>>, vector<4x8x8xf32>
    "tpu.trace_start"() <{level = 10 : i32, message = "hqd,hkd->hqk"}> : () -> ()
    %cst_25 = arith.constant dense<0.000000e+00> : vector<4x8x8xf32>
    %29 = tpu.matmul %26, %27, %cst_25 {dimension_numbers = #tpu.dot_dimension_numbers<[2], [2], [1], [1], [0, 0, 0, 1, 1, 1], [0], [0]>} : vector<4x8x8xf32>, vector<4x8x8xf32>, vector<4x8x8xf32> -> vector<4x8x8xf32>
    "tpu.trace_stop"() : () -> ()
    %cst_26 = arith.constant dense<0xFF800000> : vector<4x8xf32>
    %30 = vector.multi_reduction <maximumf>, %29, %cst_26 [2] : vector<4x8x8xf32> to vector<4x8xf32>
    %31 = vector.shape_cast %30 : vector<4x8xf32> to vector<4x8x1xf32>
    %32 = vector.broadcast %31 : vector<4x8x1xf32> to vector<4x8x8xf32>
    %33 = arith.subf %29, %32 : vector<4x8x8xf32>
    %34 = math.exp %33 : vector<4x8x8xf32>
    %cst_27 = arith.constant dense<0.000000e+00> : vector<4x8xf32>
    %35 = vector.multi_reduction <add>, %34, %cst_27 [2] : vector<4x8x8xf32> to vector<4x8xf32>
    %36 = vector.shape_cast %35 : vector<4x8xf32> to vector<4x8x1xf32>
    %37 = tpu.reciprocal %36 {approx = true} : vector<4x8x1xf32> -> vector<4x8x1xf32>
    %38 = vector.broadcast %37 : vector<4x8x1xf32> to vector<4x8x8xf32>
    %39 = arith.mulf %34, %38 : vector<4x8x8xf32>
    "tpu.trace_start"() <{level = 10 : i32, message = "hqk,hkd->hqd"}> : () -> ()
    %cst_28 = arith.constant dense<0.000000e+00> : vector<4x8x8xf32>
    %40 = tpu.matmul %39, %28, %cst_28 {dimension_numbers = #tpu.dot_dimension_numbers<[2], [1], [1], [2], [0, 0, 0, 1, 1, 2], [0], [0]>} : vector<4x8x8xf32>, vector<4x8x8xf32>, vector<4x8x8xf32> -> vector<4x8x8xf32>
    "tpu.trace_stop"() : () -> ()
    %41 = vector.extract_strided_slice %40 {offsets = [0, 0, 0], sizes = [1, 8, 8], strides = [1, 1, 1]} : vector<4x8x8xf32> to vector<1x8x8xf32>
    %42 = vector.shape_cast %41 : vector<1x8x8xf32> to vector<8x8xf32>
    %c0_29 = arith.constant 0 : index
    %c0_30 = arith.constant 0 : index
    %43 = vector.load %arg14[%c0_29, %c0_30] : memref<8x32xf32, #tpu.memory_space<vmem>>, vector<8x8xf32>
    tpu.vector_store %arg14[%c0_29, %c0_30], %42 {strides = array<i32>} : memref<8x32xf32, #tpu.memory_space<vmem>>, vector<8x8xf32>,
    %44 = vector.extract_strided_slice %40 {offsets = [1, 0, 0], sizes = [1, 8, 8], strides = [1, 1, 1]} : vector<4x8x8xf32> to vector<1x8x8xf32>
    %45 = vector.shape_cast %44 : vector<1x8x8xf32> to vector<8x8xf32>
    %c0_31 = arith.constant 0 : index
    %c8 = arith.constant 8 : index
    %46 = vector.load %arg14[%c0_31, %c8] : memref<8x32xf32, #tpu.memory_space<vmem>>, vector<8x8xf32>
    tpu.vector_store %arg14[%c0_31, %c8], %45 {strides = array<i32>} : memref<8x32xf32, #tpu.memory_space<vmem>>, vector<8x8xf32>,
    %47 = vector.extract_strided_slice %40 {offsets = [2, 0, 0], sizes = [1, 8, 8], strides = [1, 1, 1]} : vector<4x8x8xf32> to vector<1x8x8xf32>
    %48 = vector.shape_cast %47 : vector<1x8x8xf32> to vector<8x8xf32>
    %c0_32 = arith.constant 0 : index
    %c16 = arith.constant 16 : index
    %49 = vector.load %arg14[%c0_32, %c16] : memref<8x32xf32, #tpu.memory_space<vmem>>, vector<8x8xf32>
    tpu.vector_store %arg14[%c0_32, %c16], %48 {strides = array<i32>} : memref<8x32xf32, #tpu.memory_space<vmem>>, vector<8x8xf32>,
    %50 = vector.extract_strided_slice %40 {offsets = [3, 0, 0], sizes = [1, 8, 8], strides = [1, 1, 1]} : vector<4x8x8xf32> to vector<1x8x8xf32>
    %51 = vector.shape_cast %50 : vector<1x8x8xf32> to vector<8x8xf32>
    %c0_33 = arith.constant 0 : index
    %c24 = arith.constant 24 : index
    %52 = vector.load %arg14[%c0_33, %c24] : memref<8x32xf32, #tpu.memory_space<vmem>>, vector<8x8xf32>
    tpu.vector_store %arg14[%c0_33, %c24], %51 {strides = array<i32>} : memref<8x32xf32, #tpu.memory_space<vmem>>, vector<8x8xf32>,
    %c0_34 = arith.constant 0 : index
    %c0_35 = arith.constant 0 : index
    %53 = vector.load %arg14[%c0_34, %c0_35] : memref<8x32xf32, #tpu.memory_space<vmem>>, vector<8x32xf32>
    %c0_36 = arith.constant 0 : index
    %c0_37 = arith.constant 0 : index
    %54 = vector.load %arg8[%c0_36, %c0_37] : memref<32x32xf32, #tpu.memory_space<vmem>>, vector<32x32xf32>
    %cst_38 = arith.constant dense<0.000000e+00> : vector<8x32xf32>
    %55 = tpu.matmul %53, %54, %cst_38 {dimension_numbers = #tpu.dot_dimension_numbers<[1], [0], [0], [1], [0, 0, 1, 1], [], []>} : vector<8x32xf32>, vector<32x32xf32>, vector<8x32xf32> -> vector<8x32xf32>
    %c0_39 = arith.constant 0 : index
    %c0_40 = arith.constant 0 : index
    %56 = vector.load %arg9[%c0_39, %c0_40] : memref<1x32xf32, #tpu.memory_space<vmem>>, vector<1x32xf32>
    %57 = vector.broadcast %56 : vector<1x32xf32> to vector<8x32xf32>
    %58 = arith.addf %55, %57 : vector<8x32xf32>
    %c0_41 = arith.constant 0 : index
    %c0_42 = arith.constant 0 : index
    %c0_43 = arith.constant 0 : index
    %59 = vector.load %arg10[%c0_41, %c0_42, %c0_43] : memref<1x8x32xf32, #tpu.memory_space<vmem>>, vector<1x8x32xf32>
    %60 = vector.shape_cast %59 : vector<1x8x32xf32> to vector<8x32xf32>
    %61 = vector.shape_cast %58 : vector<8x32xf32> to vector<1x8x32xf32>
    tpu.vector_store %arg10[%c0_41, %c0_42, %c0_43], %61 {strides = array<i32>} : memref<1x8x32xf32, #tpu.memory_space<vmem>>, vector<1x8x32xf32>,
    return
  }
  func.func @transform_0(%arg0: i32, %arg1: i32) -> (i32, i32, i32) {
    %c0_i32 = arith.constant 0 : i32
    %c0_i32_0 = arith.constant 0 : i32
    %c0_i32_1 = arith.constant 0 : i32
    return %arg0, %c0_i32, %c0_i32_0 : i32, i32, i32
  }
  func.func @transform_1(%arg0: i32, %arg1: i32) -> (i32, i32, i32) {
    %c0_i32 = arith.constant 0 : i32
    %c0_i32_0 = arith.constant 0 : i32
    return %arg0, %arg1, %c0_i32 : i32, i32, i32
  }
  func.func @transform_2(%arg0: i32, %arg1: i32) -> (i32, i32) {
    %c0_i32 = arith.constant 0 : i32
    %c0_i32_0 = arith.constant 0 : i32
    %c0_i32_1 = arith.constant 0 : i32
    return %c0_i32, %c0_i32_0 : i32, i32
  }
  func.func @transform_3(%arg0: i32, %arg1: i32) -> (i32, i32) {
    %c0_i32 = arith.constant 0 : i32
    %c0_i32_0 = arith.constant 0 : i32
    %c0_i32_1 = arith.constant 0 : i32
    return %c0_i32, %c0_i32_0 : i32, i32
  }
  func.func @transform_4(%arg0: i32, %arg1: i32) -> (i32, i32) {
    %c0_i32 = arith.constant 0 : i32
    %c0_i32_0 = arith.constant 0 : i32
    %c0_i32_1 = arith.constant 0 : i32
    return %c0_i32, %c0_i32_0 : i32, i32
  }
  func.func @transform_5(%arg0: i32, %arg1: i32) -> (i32, i32) {
    %c0_i32 = arith.constant 0 : i32
    %c0_i32_0 = arith.constant 0 : i32
    %c0_i32_1 = arith.constant 0 : i32
    return %c0_i32, %c0_i32_0 : i32, i32
  }
  func.func @transform_6(%arg0: i32, %arg1: i32) -> (i32, i32) {
    %c0_i32 = arith.constant 0 : i32
    %c0_i32_0 = arith.constant 0 : i32
    %c0_i32_1 = arith.constant 0 : i32
    return %c0_i32, %c0_i32_0 : i32, i32
  }
  func.func @transform_7(%arg0: i32, %arg1: i32) -> (i32, i32) {
    %c0_i32 = arith.constant 0 : i32
    %c0_i32_0 = arith.constant 0 : i32
    %c0_i32_1 = arith.constant 0 : i32
    return %c0_i32, %c0_i32_0 : i32, i32
  }
  func.func @transform_8(%arg0: i32, %arg1: i32) -> (i32, i32, i32) {
    %c0_i32 = arith.constant 0 : i32
    %c0_i32_0 = arith.constant 0 : i32
    return %arg0, %arg1, %c0_i32 : i32, i32, i32
  }
}

</mosaic_0001>

<llo_original>
// kernel: attention_forward.1
$region0: #{attention_forward.1}
  #allocation0 [shape = 'u32[]', space=smem, size = 0x4, offset = 0x4, fixed_abs, tag = 'smem constant byte address 0x4 - core index']
  #allocation1 [shape = 'u32[144,128]{1,0:T(1,128)}', space=vmem, size = 0x12000, scoped, tag = 'internal scratch']
  #allocation2 [shape = 'f32[4,8,8]{2,1,0:T(8,128)}', space=vmem, size = 0x4000, scoped, tag = 'scratch operand']
  #allocation3 [shape = 'f32[4,8,8]{2,1,0:T(8,128)}', space=vmem, size = 0x4000, scoped, tag = 'scratch operand']
  #allocation4 [shape = 'f32[4,8,8]{2,1,0:T(8,128)}', space=vmem, size = 0x4000, scoped, tag = 'scratch operand']
  #allocation5 [shape = 'f32[8,32]{1,0:T(8,128)}', space=vmem, size = 0x1000, scoped, tag = 'scratch operand']
  %s0 = inlined_call_operand.vmem [shape: f32[2,8,32], index: 0, kind: input, shape index: {}, may-alias: {0,1}]
  %s1 = inlined_call_operand.vmem [shape: f32[2,8,32], index: 1, kind: input, shape index: {}, may-alias: {0,1}]
  %s2 = inlined_call_operand.vmem [shape: f32[32,32], index: 2, kind: input, shape index: {}]
  %s3 = inlined_call_operand.vmem [shape: f32[1,32], index: 3, kind: input, shape index: {}]
  %s4 = inlined_call_operand.vmem [shape: f32[32,64], index: 4, kind: input, shape index: {}]
  %s5 = inlined_call_operand.vmem [shape: f32[1,64], index: 5, kind: input, shape index: {}]
  %s6 = inlined_call_operand.vmem [shape: f32[32,32], index: 6, kind: input, shape index: {}]
  %s7 = inlined_call_operand.vmem [shape: f32[1,32], index: 7, kind: input, shape index: {}]
  %s8 = inlined_call_operand.vmem [shape: f32[2,8,32], index: 8, kind: output, shape index: {}]
  %s9 = sld [smem:[#allocation0]]
  $region69: #{attention_forward.1} parent=0
    _
  %s11 = ssub.s32 1, %s9
  %s12 = scalar_select 0, %s11, %s9
  loop: start=0, step=1, limit=4
  $region2: #{attention_forward.1} parent=0 // loop_pre_header
    _
  $region3: #{attention_forward.1} parent=0 // loop_header
    %s14 = sphi 0, %s18
    %p15 = scmp.ge.s32.totalorder %s14, 4
    %s21 = sphi 0, %s33
    %s22 = sphi 0, %s29
    %s23 = sphi 0, %s21
    %s24 = sphi 0, %s22
    %s25 = sphi 0, %s23
    %s26 = sphi 0, %s24
    %s36 = sphi 0, %s38
    %s39 = sphi 0, %s36
    %s40 = sphi 0, %s39
    %s56 = sphi 0, %s40
    %s64 = sphi 0, %s66
    %s67 = sphi 0, %s64
    %s68 = sphi 0, %s67
    %s84 = sphi 0, %s68
    %s88 = sphi 0, %s88
    %s90 = sphi 0, %s88
    %s91 = sphi 0, %s90
    %s105 = sphi 0, %s91
    %s109 = sphi 0, %s109
    %s111 = sphi 0, %s109
    %s112 = sphi 0, %s111
    %s126 = sphi 0, %s112
    %s130 = sphi 0, %s130
    %s132 = sphi 0, %s130
    %s133 = sphi 0, %s132
    %s147 = sphi 0, %s133
    %s151 = sphi 0, %s151
    %s153 = sphi 0, %s151
    %s154 = sphi 0, %s153
    %s168 = sphi 0, %s154
    %s172 = sphi 0, %s172
    %s174 = sphi 0, %s172
    %s175 = sphi 0, %s174
    %s189 = sphi 0, %s175
    %s193 = sphi 0, %s193
    %s195 = sphi 0, %s193
    %s196 = sphi 0, %s195
    %s210 = sphi 0, %s196
    %s218 = sphi 0, %s220
    %s221 = sphi 0, %s218
    %s222 = sphi 0, %s221
    %s238 = sphi 0, %s222
  $region4: #{attention_forward.1} parent=0 // loop_header_branch
    %17 = sbr.rel (%p15) target = $region8
  $region5: #{attention_forward.1} parent=0 // loop_body
    %s19 = ssub.s32 %s14, 1
    %s20 = ssub.s32 %s14, 2
    %s27 = sadd.s32 1, %s22
    %p28 = scmp.ge.s32.totalorder %s27, 1
    %s29 = scalar_select %p28, 0, %s27
    %s30 = sadd.s32 1, %s21
    %s31 = scalar_select %p28, %s30, %s21
    %p32 = scmp.ge.s32.totalorder %s31, 2
    %s33 = scalar_select %p32, 0, %s31
    %s34 = ssub.s32 %s21, %s33
    %p35 = scmp.eq.s32.totalorder %s34, 0
    %s37 = sadd.s32 %s36, 1
    %s38 = scalar_select %p35, %s36, %s37
    %p41 = pneg %p35
    %p42 = scmp.eq.s32.totalorder %s14, 1
    %p43 = por %p41, %p42
    %p44 = scmp.ne.s32.totalorder %s36, %s39
    %p45 = scmp.eq.s32.totalorder %s14, 0
    %p46 = por %p44, %p45
    %p47 = scmp.ne.s32.totalorder %s36, %s39
    %p48 = scmp.eq.s32.totalorder %s19, 1
    %p49 = por %p47, %p48
    %p50 = scmp.ne.s32.totalorder %s39, %s40
    %p51 = scmp.eq.s32.totalorder %s19, 0
    %p52 = por %p50, %p51
    %p53 = scmp.ne.s32.totalorder %s39, %s40
    %p54 = scmp.eq.s32.totalorder %s20, 1
    %p55 = por %p53, %p54
    %p57 = scmp.ne.s32.totalorder %s40, %s56
    %p58 = scmp.eq.s32.totalorder %s20, 0
    %p59 = por %p57, %p58
    %s60 = ssub.s32 %s21, %s33
    %s61 = ssub.s32 %s22, %s29
    %s62 = sor.u32 %s60, %s61
    %p63 = scmp.eq.s32.totalorder %s62, 0
    %s65 = sadd.s32 %s64, 1
    %s66 = scalar_select %p63, %s64, %s65
    %p69 = pneg %p63
    %p70 = scmp.eq.s32.totalorder %s14, 1
    %p71 = por %p69, %p70
    %p72 = scmp.ne.s32.totalorder %s64, %s67
    %p73 = scmp.eq.s32.totalorder %s14, 0
    %p74 = por %p72, %p73
    %p75 = scmp.ne.s32.totalorder %s64, %s67
    %p76 = scmp.eq.s32.totalorder %s19, 1
    %p77 = por %p75, %p76
    %p78 = scmp.ne.s32.totalorder %s67, %s68
    %p79 = scmp.eq.s32.totalorder %s19, 0
    %p80 = por %p78, %p79
    %p81 = scmp.ne.s32.totalorder %s67, %s68
    %p82 = scmp.eq.s32.totalorder %s20, 1
    %p83 = por %p81, %p82
    %p85 = scmp.ne.s32.totalorder %s68, %s84
    %p86 = scmp.eq.s32.totalorder %s20, 0
    %p87 = por %p85, %p86
    %s89 = sadd.s32 %s88, 1
    %p92 = scmp.eq.s32.totalorder %s14, 1
    %p93 = scmp.ne.s32.totalorder %s88, %s90
    %p94 = scmp.eq.s32.totalorder %s14, 0
    %p95 = por %p93, %p94
    %p96 = scmp.ne.s32.totalorder %s88, %s90
    %p97 = scmp.eq.s32.totalorder %s19, 1
    %p98 = por %p96, %p97
    %p99 = scmp.ne.s32.totalorder %s90, %s91
    %p100 = scmp.eq.s32.totalorder %s19, 0
    %p101 = por %p99, %p100
    %p102 = scmp.ne.s32.totalorder %s90, %s91
    %p103 = scmp.eq.s32.totalorder %s20, 1
    %p104 = por %p102, %p103
    %p106 = scmp.ne.s32.totalorder %s91, %s105
    %p107 = scmp.eq.s32.totalorder %s20, 0
    %p108 = por %p106, %p107
    %s110 = sadd.s32 %s109, 1
    %p113 = scmp.eq.s32.totalorder %s14, 1
    %p114 = scmp.ne.s32.totalorder %s109, %s111
    %p115 = scmp.eq.s32.totalorder %s14, 0
    %p116 = por %p114, %p115
    %p117 = scmp.ne.s32.totalorder %s109, %s111
    %p118 = scmp.eq.s32.totalorder %s19, 1
    %p119 = por %p117, %p118
    %p120 = scmp.ne.s32.totalorder %s111, %s112
    %p121 = scmp.eq.s32.totalorder %s19, 0
    %p122 = por %p120, %p121
    %p123 = scmp.ne.s32.totalorder %s111, %s112
    %p124 = scmp.eq.s32.totalorder %s20, 1
    %p125 = por %p123, %p124
    %p127 = scmp.ne.s32.totalorder %s112, %s126
    %p128 = scmp.eq.s32.totalorder %s20, 0
    %p129 = por %p127, %p128
    %s131 = sadd.s32 %s130, 1
    %p134 = scmp.eq.s32.totalorder %s14, 1
    %p135 = scmp.ne.s32.totalorder %s130, %s132
    %p136 = scmp.eq.s32.totalorder %s14, 0
    %p137 = por %p135, %p136
    %p138 = scmp.ne.s32.totalorder %s130, %s132
    %p139 = scmp.eq.s32.totalorder %s19, 1
    %p140 = por %p138, %p139
    %p141 = scmp.ne.s32.totalorder %s132, %s133
    %p142 = scmp.eq.s32.totalorder %s19, 0
    %p143 = por %p141, %p142
    %p144 = scmp.ne.s32.totalorder %s132, %s133
    %p145 = scmp.eq.s32.totalorder %s20, 1
    %p146 = por %p144, %p145
    %p148 = scmp.ne.s32.totalorder %s133, %s147
    %p149 = scmp.eq.s32.totalorder %s20, 0
    %p150 = por %p148, %p149
    %s152 = sadd.s32 %s151, 1
    %p155 = scmp.eq.s32.totalorder %s14, 1
    %p156 = scmp.ne.s32.totalorder %s151, %s153
    %p157 = scmp.eq.s32.totalorder %s14, 0
    %p158 = por %p156, %p157
    %p159 = scmp.ne.s32.totalorder %s151, %s153
    %p160 = scmp.eq.s32.totalorder %s19, 1
    %p161 = por %p159, %p160
    %p162 = scmp.ne.s32.totalorder %s153, %s154
    %p163 = scmp.eq.s32.totalorder %s19, 0
    %p164 = por %p162, %p163
    %p165 = scmp.ne.s32.totalorder %s153, %s154
    %p166 = scmp.eq.s32.totalorder %s20, 1
    %p167 = por %p165, %p166
    %p169 = scmp.ne.s32.totalorder %s154, %s168
    %p170 = scmp.eq.s32.totalorder %s20, 0
    %p171 = por %p169, %p170
    %s173 = sadd.s32 %s172, 1
    %p176 = scmp.eq.s32.totalorder %s14, 1
    %p177 = scmp.ne.s32.totalorder %s172, %s174
    %p178 = scmp.eq.s32.totalorder %s14, 0
    %p179 = por %p177, %p178
    %p180 = scmp.ne.s32.totalorder %s172, %s174
    %p181 = scmp.eq.s32.totalorder %s19, 1
    %p182 = por %p180, %p181
    %p183 = scmp.ne.s32.totalorder %s174, %s175
    %p184 = scmp.eq.s32.totalorder %s19, 0
    %p185 = por %p183, %p184
    %p186 = scmp.ne.s32.totalorder %s174, %s175
    %p187 = scmp.eq.s32.totalorder %s20, 1
    %p188 = por %p186, %p187
    %p190 = scmp.ne.s32.totalorder %s175, %s189
    %p191 = scmp.eq.s32.totalorder %s20, 0
    %p192 = por %p190, %p191
    %s194 = sadd.s32 %s193, 1
    %p197 = scmp.eq.s32.totalorder %s14, 1
    %p198 = scmp.ne.s32.totalorder %s193, %s195
    %p199 = scmp.eq.s32.totalorder %s14, 0
    %p200 = por %p198, %p199
    %p201 = scmp.ne.s32.totalorder %s193, %s195
    %p202 = scmp.eq.s32.totalorder %s19, 1
    %p203 = por %p201, %p202
    %p204 = scmp.ne.s32.totalorder %s195, %s196
    %p205 = scmp.eq.s32.totalorder %s19, 0
    %p206 = por %p204, %p205
    %p207 = scmp.ne.s32.totalorder %s195, %s196
    %p208 = scmp.eq.s32.totalorder %s20, 1
    %p209 = por %p207, %p208
    %p211 = scmp.ne.s32.totalorder %s196, %s210
    %p212 = scmp.eq.s32.totalorder %s20, 0
    %p213 = por %p211, %p212
    %s214 = ssub.s32 %s21, %s33
    %s215 = ssub.s32 %s22, %s29
    %s216 = sor.u32 %s214, %s215
    %p217 = scmp.eq.s32.totalorder %s216, 0
    %s219 = sadd.s32 %s218, 1
    %s220 = scalar_select %p217, %s218, %s219
    %p223 = pneg %p217
    %p224 = scmp.eq.s32.totalorder %s14, 1
    %p225 = por %p223, %p224
    %p226 = scmp.ne.s32.totalorder %s218, %s221
    %p227 = scmp.eq.s32.totalorder %s14, 0
    %p228 = por %p226, %p227
    %p229 = scmp.ne.s32.totalorder %s218, %s221
    %p230 = scmp.eq.s32.totalorder %s19, 1
    %p231 = por %p229, %p230
    %p232 = scmp.ne.s32.totalorder %s221, %s222
    %p233 = scmp.eq.s32.totalorder %s19, 0
    %p234 = por %p232, %p233
    %p235 = scmp.ne.s32.totalorder %s221, %s222
    %p236 = scmp.eq.s32.totalorder %s20, 1
    %p237 = por %p235, %p236
    %p239 = scmp.ne.s32.totalorder %s222, %s238
    %p240 = scmp.eq.s32.totalorder %s20, 0
    %p241 = por %p239, %p240
    %p242 = scmp.le.s32.totalorder 1, %s14
    %p243 = scmp.lt.s32.totalorder %s14, 3
    %p244 = pnand %p242, %p243
    %p245 = pneg %p244
    // Predicated region
    $region9: #{attention_forward.1} parent=5 // pred_check
      _
    $region10: #{attention_forward.1} parent=5 // pred_check_branch
      %247 = sbr.rel (%p244) target = $region12
    $region11: #{attention_forward.1} parent=5 // pred_region
      %s248 = ssub.s32 %s14, 1
      // Predicated region
      $region13: #{attention_forward.1} parent=11 // pred_check
        %p249 = pneg %p101
      $region14: #{attention_forward.1} parent=11 // pred_check_branch
        %251 = sbr.rel (%p249) target = $region16
      $region15: #{attention_forward.1} parent=11 // pred_region
        _
      $region16: #{attention_forward.1} parent=11 // pred_fallthru
        _
      // Predicated region
      $region17: #{attention_forward.1} parent=11 // pred_check
        %p252 = pneg %p122
      $region18: #{attention_forward.1} parent=11 // pred_check_branch
        %254 = sbr.rel (%p252) target = $region20
      $region19: #{attention_forward.1} parent=11 // pred_region
        _
      $region20: #{attention_forward.1} parent=11 // pred_fallthru
        _
      // Predicated region
      $region21: #{attention_forward.1} parent=11 // pred_check
        %p255 = pneg %p143
      $region22: #{attention_forward.1} parent=11 // pred_check_branch
        %257 = sbr.rel (%p255) target = $region24
      $region23: #{attention_forward.1} parent=11 // pred_region
        _
      $region24: #{attention_forward.1} parent=11 // pred_fallthru
        _
      // Predicated region
      $region25: #{attention_forward.1} parent=11 // pred_check
        %p258 = pneg %p164
      $region26: #{attention_forward.1} parent=11 // pred_check_branch
        %260 = sbr.rel (%p258) target = $region28
      $region27: #{attention_forward.1} parent=11 // pred_region
        _
      $region28: #{attention_forward.1} parent=11 // pred_fallthru
        _
      // Predicated region
      $region29: #{attention_forward.1} parent=11 // pred_check
        %p261 = pneg %p185
      $region30: #{attention_forward.1} parent=11 // pred_check_branch
        %263 = sbr.rel (%p261) target = $region32
      $region31: #{attention_forward.1} parent=11 // pred_region
        _
      $region32: #{attention_forward.1} parent=11 // pred_fallthru
        _
      // Predicated region
      $region33: #{attention_forward.1} parent=11 // pred_check
        %p264 = pneg %p206
      $region34: #{attention_forward.1} parent=11 // pred_check_branch
        %266 = sbr.rel (%p264) target = $region36
      $region35: #{attention_forward.1} parent=11 // pred_region
        _
      $region36: #{attention_forward.1} parent=11 // pred_fallthru
        _
    $region12: #{attention_forward.1} parent=5 // pred_fallthru
      _
    %p267 = scmp.lt.s32.totalorder %s14, 2
    // Predicated region
    $region37: #{attention_forward.1} parent=5 // pred_check
      %p268 = pneg %p267
    $region38: #{attention_forward.1} parent=5 // pred_check_branch
      %270 = sbr.rel (%p268) target = $region40
    $region39: #{attention_forward.1} parent=5 // pred_region
      // Predicated region
      $region41: #{attention_forward.1} parent=39 // pred_check
        %p271 = pneg %p46
      $region42: #{attention_forward.1} parent=39 // pred_check_branch
        %273 = sbr.rel (%p271) target = $region44
      $region43: #{attention_forward.1} parent=39 // pred_region
        %p274 = scmp.lt.s32.totalorder %s21, 1
        %s275 = scalar_select %p274, %s21, 1
        %s276 = smul.addr %s275, 8
        %s277 = scalar_lea.vmem %s0, %s276
      $region44: #{attention_forward.1} parent=39 // pred_fallthru
        _
      // Predicated region
      $region45: #{attention_forward.1} parent=39 // pred_check
        %p278 = pneg %p74
      $region46: #{attention_forward.1} parent=39 // pred_check_branch
        %280 = sbr.rel (%p278) target = $region48
      $region47: #{attention_forward.1} parent=39 // pred_region
        %p281 = scmp.lt.s32.totalorder %s21, 1
        %s282 = scalar_select %p281, %s21, 1
        %p283 = scmp.lt.s32.totalorder %s22, 0
        %s284 = scalar_select %p283, %s22, 0
        %s285 = sadd.s32 %s284, %s282
        %s286 = smul.addr %s285, 8
        %s287 = scalar_lea.vmem %s1, %s286
      $region48: #{attention_forward.1} parent=39 // pred_fallthru
        _
    $region40: #{attention_forward.1} parent=5 // pred_fallthru
      _
    %p288 = scmp.le.s32.totalorder 1, %s14
    %p289 = scmp.lt.s32.totalorder %s14, 3
    %p290 = pnand %p288, %p289
    %p291 = pneg %p290
    // Predicated region
    $region49: #{attention_forward.1} parent=5 // pred_check
      _
    $region50: #{attention_forward.1} parent=5 // pred_check_branch
      %293 = sbr.rel (%p290) target = $region52
    $region51: #{attention_forward.1} parent=5 // pred_region
      %s294 = ssub.s32 %s14, 1
      %p295 = scmp.lt.s32.totalorder %s23, 1
      %s296 = scalar_select %p295, %s23, 1
      %s297 = smul.addr %s296, 8
      %s298 = scalar_lea.vmem %s0, %s297
      %p299 = pneg %p52
      %p300 = pneg %p49
      %p301 = scmp.lt.s32.totalorder %s23, 1
      %s302 = scalar_select %p301, %s23, 1
      %p303 = scmp.lt.s32.totalorder %s24, 0
      %s304 = scalar_select %p303, %s24, 0
      %s305 = sadd.s32 %s304, %s302
      %s306 = smul.addr %s305, 8
      %s307 = scalar_lea.vmem %s1, %s306
      %p308 = pneg %p80
      %p309 = pneg %p77
      %p310 = pneg %p101
      %p311 = pneg %p98
      %p312 = pneg %p122
      %p313 = pneg %p119
      %p314 = pneg %p143
      %p315 = pneg %p140
      %p316 = pneg %p164
      %p317 = pneg %p161
      %p318 = pneg %p185
      %p319 = pneg %p182
      %p320 = pneg %p206
      %p321 = pneg %p203
      %p322 = pneg %p234
      %p323 = pneg %p231
      %p324 = scmp.lt.s32.totalorder %s23, 1
      %s325 = scalar_select %p324, %s23, 1
      %p326 = scmp.lt.s32.totalorder %s24, 0
      %s327 = scalar_select %p326, %s24, 0
      %s328 = sadd.s32 %s327, %s325
      %s329 = smul.addr %s328, 8
      %s330 = scalar_lea.vmem %s8, %s329
      %p331 = scmp.lt.s32.totalorder %s23, 1
      %s332 = scalar_select %p331, %s23, 1
      %s333 = smul.addr %s332, 8
      %s334 = scalar_lea.vmem %s0, %s333
      %p335 = scmp.lt.s32.totalorder %s23, 1
      %s336 = scalar_select %p335, %s23, 1
      %p337 = scmp.lt.s32.totalorder %s24, 0
      %s338 = scalar_select %p337, %s24, 0
      %s339 = sadd.s32 %s338, %s336
      %s340 = smul.addr %s339, 8
      %s341 = scalar_lea.vmem %s1, %s340
      %p342 = scmp.lt.s32.totalorder %s23, 1
      %s343 = scalar_select %p342, %s23, 1
      %p344 = scmp.lt.s32.totalorder %s24, 0
      %s345 = scalar_select %p344, %s24, 0
      %s346 = sadd.s32 %s345, %s343
      %s347 = smul.addr %s346, 8
      %s348 = scalar_lea.vmem %s8, %s347
      %p349 = scmp.eq.s32.totalorder %s24, 0
      // Predicated region
      $region53: #{attention_forward.1} parent=51 // pred_check
        %p350 = pneg %p349
      $region54: #{attention_forward.1} parent=51 // pred_check_branch
        %352 = sbr.rel (%p350) target = $region56
      $region55: #{attention_forward.1} parent=51 // pred_region
        %v353 = vld [vmem:[%s334] sm:$0xff]
        %v354 = vld [vmem:[%s4] sm:$0xff]
        %v355 = vld [vmem:[%s4 + $0x8] sm:$0xff]
        %v356 = vld [vmem:[%s4 + $0x10] sm:$0xff]
        %v357 = vld [vmem:[%s4 + $0x18] sm:$0xff]
        %v358 = vld [vmem:[%s5] sm:$0x1]
        %v360 = vlaneseq
        %v361 = vshrl.u32 %v360, 7
        %v362 = vsub.s32 0, %v361
        %v363 = vrot.slane %v358, %v362
        %vm365 = vcmask 261120
        %v367 = vsel %vm365, %v353, 0
        %369 = vmatprep.subr.mxu0 0.0
        %370 = vmatpush1.msra.mxu0 %v354
        %371 = vmatprep.subr.mxu0 0.0
        %372 = vmatpush1.msra.mxu0 %v355
        %373 = vmatprep.subr.mxu0 0.0
        %374 = vmatpush1.msra.mxu0 %v356
        %375 = vmatprep.subr.mxu0 0.0
        %376 = vmatpush1.msra.mxu0 %v357
        %377 = vmatprep.subr.mxu0 0.0
        %378 = vmatpush1.msra.mxu0 0.0
        %379 = vmatprep.subr.mxu0 0.0
        %380 = vmatpush1.msra.mxu0 0.0
        %381 = vmatprep.subr.mxu0 0.0
        %382 = vmatpush1.msra.mxu0 0.0
        %383 = vmatprep.subr.mxu0 0.0
        %384 = vmatpush1.msra.mxu0 0.0
        %385 = vmatprep.subr.mxu0 0.0
        %386 = vmatpush1.msra.mxu0 0.0
        %387 = vmatprep.subr.mxu0 0.0
        %388 = vmatpush1.msra.mxu0 0.0
        %389 = vmatprep.subr.mxu0 0.0
        %390 = vmatpush1.msra.mxu0 0.0
        %391 = vmatprep.subr.mxu0 0.0
        %392 = vmatpush1.msra.mxu0 0.0
        %393 = vmatprep.subr.mxu0 0.0
        %394 = vmatpush1.msra.mxu0 0.0
        %395 = vmatprep.subr.mxu0 0.0
        %396 = vmatpush1.msra.mxu0 0.0
        %397 = vmatprep.subr.mxu0 0.0
        %398 = vmatpush1.msra.mxu0 0.0
        %399 = vmatprep.subr.mxu0 0.0
        %400 = vmatpush1.msra.mxu0 0.0
        %401 = vmatprep.subr.mxu0 0.0
        %402 = vmatpush1.msra.mxu0 0.0
        %403 = vmatprep.subr.mxu0 0.0
        %404 = vmatpush1.msra.mxu0 0.0
        %405 = vmatprep.subr.mxu0 0.0
        %406 = vmatpush1.msra.mxu0 0.0
        %407 = vmatprep.subr.mxu0 0.0
        %408 = vmatpush1.msra.mxu0 0.0
        %409 = vmatprep.subr.mxu0 0.0
        %410 = vmatpush1.msra.mxu0 0.0
        %411 = vmatprep.subr.mxu0 0.0
        %412 = vmatpush1.msra.mxu0 0.0
        %413 = vmatprep.subr.mxu0 0.0
        %414 = vmatpush1.msra.mxu0 0.0
        %415 = vmatprep.subr.mxu0 0.0
        %416 = vmatpush1.msra.mxu0 0.0
        %417 = vmatprep.subr.mxu0 0.0
        %418 = vmatpush1.msra.mxu0 0.0
        %419 = vmatprep.subr.mxu0 0.0
        %420 = vmatpush1.msra.mxu0 0.0
        %421 = vmatprep.subr.mxu0 0.0
        %422 = vmatpush1.msra.mxu0 0.0
        %423 = vmatprep.subr.mxu0 0.0
        %424 = vmatpush1.msra.mxu0 0.0
        %425 = vmatprep.subr.mxu0 0.0
        %426 = vmatpush1.msra.mxu0 0.0
        %427 = vmatprep.subr.mxu0 0.0
        %428 = vmatpush1.msra.mxu0 0.0
        %429 = vmatprep.subr.mxu0 0.0
        %430 = vmatpush1.msra.mxu0 0.0
        %431 = vmatprep.subr.mxu0 0.0
        %432 = vmatpush1.msra.mxu0 0.0
        %433 = vmatprep.mubr.f32.mxu0 0.0
        %434 = vmatmul.mubr.f32.gmra.mrb[0].mxu0 %v367
        %v435 = vpop.f32.mrb[0].mxu0
        %v436 = vadd.f32 %v363, %v435
        %v437 = vpop.f32.mrb[0].mxu0
        %438 = vdwg.mxu0
        %vm439 = vcmask 64512
        %440 = vst.msk [vmem:[#allocation2] sm:$0xff] %vm439, %v436
        %442 = vrot.lane.b32.xlu0 %v436, 96
        %v443 = vpop.permute.xlu0 %442
        %445 = vst.msk [vmem:[#allocation3] sm:$0xff] %vm439, %v443
        %446 = vrot.lane.b32.xlu0 %v436, 120
        %v447 = vpop.permute.xlu0 %446
        %s449 = scalar_lea.vmem [#allocation2], 8
        %450 = vst.msk [vmem:[%s449] sm:$0xff] %vm439, %v447
        %451 = vrot.lane.b32.xlu0 %v436, 88
        %v452 = vpop.permute.xlu0 %451
        %s454 = scalar_lea.vmem [#allocation3], 8
        %455 = vst.msk [vmem:[%s454] sm:$0xff] %vm439, %v452
        %456 = vrot.lane.b32.xlu0 %v436, 112
        %v457 = vpop.permute.xlu0 %456
        %s459 = scalar_lea.vmem [#allocation2], 16
        %460 = vst.msk [vmem:[%s459] sm:$0xff] %vm439, %v457
        %461 = vrot.lane.b32.xlu0 %v436, 80
        %v462 = vpop.permute.xlu0 %461
        %s464 = scalar_lea.vmem [#allocation3], 16
        %465 = vst.msk [vmem:[%s464] sm:$0xff] %vm439, %v462
        %466 = vrot.lane.b32.xlu0 %v436, 104
        %v467 = vpop.permute.xlu0 %466
        %s469 = scalar_lea.vmem [#allocation2], 24
        %470 = vst.msk [vmem:[%s469] sm:$0xff] %vm439, %v467
        %471 = vrot.lane.b32.xlu0 %v436, 72
        %v472 = vpop.permute.xlu0 %471
        %s474 = scalar_lea.vmem [#allocation3], 24
        %475 = vst.msk [vmem:[%s474] sm:$0xff] %vm439, %v472
      $region56: #{attention_forward.1} parent=51 // pred_fallthru
        _
      %v476 = vld [vmem:[%s341] sm:$0xff]
      %v477 = vld [vmem:[%s2] sm:$0xff]
      %v478 = vld [vmem:[%s2 + $0x8] sm:$0xff]
      %v479 = vld [vmem:[%s2 + $0x10] sm:$0xff]
      %v480 = vld [vmem:[%s2 + $0x18] sm:$0xff]
      %v481 = vld [vmem:[%s3] sm:$0x1]
      %v483 = vlaneseq
      %v484 = vshrl.u32 %v483, 7
      %v485 = vsub.s32 0, %v484
      %v486 = vrot.slane %v481, %v485
      %vm488 = vcmask 261120
      %v490 = vsel %vm488, %v476, 0
      %492 = vmatprep.subr.mxu0 0.0
      %493 = vmatpush1.msra.mxu0 %v477
      %494 = vmatprep.subr.mxu0 0.0
      %495 = vmatpush1.msra.mxu0 %v478
      %496 = vmatprep.subr.mxu0 0.0
      %497 = vmatpush1.msra.mxu0 %v479
      %498 = vmatprep.subr.mxu0 0.0
      %499 = vmatpush1.msra.mxu0 %v480
      %500 = vmatprep.subr.mxu0 0.0
      %501 = vmatpush1.msra.mxu0 0.0
      %502 = vmatprep.subr.mxu0 0.0
      %503 = vmatpush1.msra.mxu0 0.0
      %504 = vmatprep.subr.mxu0 0.0
      %505 = vmatpush1.msra.mxu0 0.0
      %506 = vmatprep.subr.mxu0 0.0
      %507 = vmatpush1.msra.mxu0 0.0
      %508 = vmatprep.subr.mxu0 0.0
      %509 = vmatpush1.msra.mxu0 0.0
      %510 = vmatprep.subr.mxu0 0.0
      %511 = vmatpush1.msra.mxu0 0.0
      %512 = vmatprep.subr.mxu0 0.0
      %513 = vmatpush1.msra.mxu0 0.0
      %514 = vmatprep.subr.mxu0 0.0
      %515 = vmatpush1.msra.mxu0 0.0
      %516 = vmatprep.subr.mxu0 0.0
      %517 = vmatpush1.msra.mxu0 0.0
      %518 = vmatprep.subr.mxu0 0.0
      %519 = vmatpush1.msra.mxu0 0.0
      %520 = vmatprep.subr.mxu0 0.0
      %521 = vmatpush1.msra.mxu0 0.0
      %522 = vmatprep.subr.mxu0 0.0
      %523 = vmatpush1.msra.mxu0 0.0
      %524 = vmatprep.subr.mxu0 0.0
      %525 = vmatpush1.msra.mxu0 0.0
      %526 = vmatprep.subr.mxu0 0.0
      %527 = vmatpush1.msra.mxu0 0.0
      %528 = vmatprep.subr.mxu0 0.0
      %529 = vmatpush1.msra.mxu0 0.0
      %530 = vmatprep.subr.mxu0 0.0
      %531 = vmatpush1.msra.mxu0 0.0
      %532 = vmatprep.subr.mxu0 0.0
      %533 = vmatpush1.msra.mxu0 0.0
      %534 = vmatprep.subr.mxu0 0.0
      %535 = vmatpush1.msra.mxu0 0.0
      %536 = vmatprep.subr.mxu0 0.0
      %537 = vmatpush1.msra.mxu0 0.0
      %538 = vmatprep.subr.mxu0 0.0
      %539 = vmatpush1.msra.mxu0 0.0
      %540 = vmatprep.subr.mxu0 0.0
      %541 = vmatpush1.msra.mxu0 0.0
      %542 = vmatprep.subr.mxu0 0.0
      %543 = vmatpush1.msra.mxu0 0.0
      %544 = vmatprep.subr.mxu0 0.0
      %545 = vmatpush1.msra.mxu0 0.0
      %546 = vmatprep.subr.mxu0 0.0
      %547 = vmatpush1.msra.mxu0 0.0
      %548 = vmatprep.subr.mxu0 0.0
      %549 = vmatpush1.msra.mxu0 0.0
      %550 = vmatprep.subr.mxu0 0.0
      %551 = vmatpush1.msra.mxu0 0.0
      %552 = vmatprep.subr.mxu0 0.0
      %553 = vmatpush1.msra.mxu0 0.0
      %554 = vmatprep.subr.mxu0 0.0
      %555 = vmatpush1.msra.mxu0 0.0
      %556 = vmatprep.mubr.f32.mxu0 0.0
      %557 = vmatmul.mubr.f32.gmra.mrb[0].mxu0 %v490
      %v558 = vpop.f32.mrb[0].mxu0
      %v559 = vadd.f32 %v486, %v558
      %v560 = vpop.f32.mrb[0].mxu0
      %561 = vdwg.mxu0
      %vm562 = vcmask 64512
      %563 = vst.msk [vmem:[#allocation4] sm:$0xff] %vm562, %v559
      %565 = vrot.lane.b32.xlu0 %v559, 120
      %v566 = vpop.permute.xlu0 %565
      %s568 = scalar_lea.vmem [#allocation4], 8
      %569 = vst.msk [vmem:[%s568] sm:$0xff] %vm562, %v566
      %570 = vrot.lane.b32.xlu0 %v559, 112
      %v571 = vpop.permute.xlu0 %570
      %s573 = scalar_lea.vmem [#allocation4], 16
      %574 = vst.msk [vmem:[%s573] sm:$0xff] %vm562, %v571
      %575 = vrot.lane.b32.xlu0 %v559, 104
      %v576 = vpop.permute.xlu0 %575
      %s578 = scalar_lea.vmem [#allocation4], 24
      %579 = vst.msk [vmem:[%s578] sm:$0xff] %vm562, %v576
      %v580 = vld [vmem:[#allocation4] sm:$0xff]
      %v581 = vld [vmem:[#allocation4 + $0x8] sm:$0xff]
      %v582 = vld [vmem:[#allocation4 + $0x10] sm:$0xff]
      %v583 = vld [vmem:[#allocation4 + $0x18] sm:$0xff]
      %v584 = vld [vmem:[#allocation2] sm:$0xff]
      %v585 = vld [vmem:[#allocation2 + $0x8] sm:$0xff]
      %v586 = vld [vmem:[#allocation2 + $0x10] sm:$0xff]
      %v587 = vld [vmem:[#allocation2 + $0x18] sm:$0xff]
      %v588 = vld [vmem:[#allocation3] sm:$0xff]
      %v589 = vld [vmem:[#allocation3 + $0x8] sm:$0xff]
      %v590 = vld [vmem:[#allocation3 + $0x10] sm:$0xff]
      %v591 = vld [vmem:[#allocation3 + $0x18] sm:$0xff]
      %v593 = vsel %vm562, %v580, 0
      %v596 = vsel %vm562, %v584, 0
      %598 = vmatprep.subr.mxu0 0.0
      %599 = vmatpush1.xpose.msra.mxu0 %v596
      %600 = vmatprep.subr.mxu0 0.0
      %601 = vmatpush1.xpose.msra.mxu0 0.0
      %602 = vmatprep.subr.mxu0 0.0
      %603 = vmatpush1.xpose.msra.mxu0 0.0
      %604 = vmatprep.subr.mxu0 0.0
      %605 = vmatpush1.xpose.msra.mxu0 0.0
      %606 = vmatprep.subr.mxu0 0.0
      %607 = vmatpush1.xpose.msra.mxu0 0.0
      %608 = vmatprep.subr.mxu0 0.0
      %609 = vmatpush1.xpose.msra.mxu0 0.0
      %610 = vmatprep.subr.mxu0 0.0
      %611 = vmatpush1.xpose.msra.mxu0 0.0
      %612 = vmatprep.subr.mxu0 0.0
      %613 = vmatpush1.xpose.msra.mxu0 0.0
      %614 = vmatprep.subr.mxu0 0.0
      %615 = vmatpush1.xpose.msra.mxu0 0.0
      %616 = vmatprep.subr.mxu0 0.0
      %617 = vmatpush1.xpose.msra.mxu0 0.0
      %618 = vmatprep.subr.mxu0 0.0
      %619 = vmatpush1.xpose.msra.mxu0 0.0
      %620 = vmatprep.subr.mxu0 0.0
      %621 = vmatpush1.xpose.msra.mxu0 0.0
      %622 = vmatprep.subr.mxu0 0.0
      %623 = vmatpush1.xpose.msra.mxu0 0.0
      %624 = vmatprep.subr.mxu0 0.0
      %625 = vmatpush1.xpose.msra.mxu0 0.0
      %626 = vmatprep.subr.mxu0 0.0
      %627 = vmatpush1.xpose.msra.mxu0 0.0
      %628 = vmatprep.subr.mxu0 0.0
      %629 = vmatpush1.xpose.msra.mxu0 0.0
      %630 = vmatprep.subr.mxu0 0.0
      %631 = vmatpush1.xpose.msra.mxu0 0.0
      %632 = vmatprep.subr.mxu0 0.0
      %633 = vmatpush1.xpose.msra.mxu0 0.0
      %634 = vmatprep.subr.mxu0 0.0
      %635 = vmatpush1.xpose.msra.mxu0 0.0
      %636 = vmatprep.subr.mxu0 0.0
      %637 = vmatpush1.xpose.msra.mxu0 0.0
      %638 = vmatprep.subr.mxu0 0.0
      %639 = vmatpush1.xpose.msra.mxu0 0.0
      %640 = vmatprep.subr.mxu0 0.0
      %641 = vmatpush1.xpose.msra.mxu0 0.0
      %642 = vmatprep.subr.mxu0 0.0
      %643 = vmatpush1.xpose.msra.mxu0 0.0
      %644 = vmatprep.subr.mxu0 0.0
      %645 = vmatpush1.xpose.msra.mxu0 0.0
      %646 = vmatprep.subr.mxu0 0.0
      %647 = vmatpush1.xpose.msra.mxu0 0.0
      %648 = vmatprep.subr.mxu0 0.0
      %649 = vmatpush1.xpose.msra.mxu0 0.0
      %650 = vmatprep.subr.mxu0 0.0
      %651 = vmatpush1.xpose.msra.mxu0 0.0
      %652 = vmatprep.subr.mxu0 0.0
      %653 = vmatpush1.xpose.msra.mxu0 0.0
      %654 = vmatprep.subr.mxu0 0.0
      %655 = vmatpush1.xpose.msra.mxu0 0.0
      %656 = vmatprep.subr.mxu0 0.0
      %657 = vmatpush1.xpose.msra.mxu0 0.0
      %658 = vmatprep.subr.mxu0 0.0
      %659 = vmatpush1.xpose.msra.mxu0 0.0
      %660 = vmatprep.subr.mxu0 0.0
      %661 = vmatpush1.xpose.msra.mxu0 0.0
      %662 = vmatprep.mubr.f32.mxu0 0.0
      %663 = vmatmul.mubr.f32.gmra.mrb[0].mxu0 %v593
      %v664 = vpop.f32.mrb[0].mxu0
      %v665 = vadd.f32 0.0, %v664
      %v666 = vpop.f32.mrb[0].mxu0
      %667 = vdwg.mxu0
      %v669 = vsel %vm562, %v581, 0
      %v672 = vsel %vm562, %v585, 0
      %674 = vmatprep.subr.mxu0 0.0
      %675 = vmatpush1.xpose.msra.mxu0 %v672
      %676 = vmatprep.subr.mxu0 0.0
      %677 = vmatpush1.xpose.msra.mxu0 0.0
      %678 = vmatprep.subr.mxu0 0.0
      %679 = vmatpush1.xpose.msra.mxu0 0.0
      %680 = vmatprep.subr.mxu0 0.0
      %681 = vmatpush1.xpose.msra.mxu0 0.0
      %682 = vmatprep.subr.mxu0 0.0
      %683 = vmatpush1.xpose.msra.mxu0 0.0
      %684 = vmatprep.subr.mxu0 0.0
      %685 = vmatpush1.xpose.msra.mxu0 0.0
      %686 = vmatprep.subr.mxu0 0.0
      %687 = vmatpush1.xpose.msra.mxu0 0.0
      %688 = vmatprep.subr.mxu0 0.0
      %689 = vmatpush1.xpose.msra.mxu0 0.0
      %690 = vmatprep.subr.mxu0 0.0
      %691 = vmatpush1.xpose.msra.mxu0 0.0
      %692 = vmatprep.subr.mxu0 0.0
      %693 = vmatpush1.xpose.msra.mxu0 0.0
      %694 = vmatprep.subr.mxu0 0.0
      %695 = vmatpush1.xpose.msra.mxu0 0.0
      %696 = vmatprep.subr.mxu0 0.0
      %697 = vmatpush1.xpose.msra.mxu0 0.0
      %698 = vmatprep.subr.mxu0 0.0
      %699 = vmatpush1.xpose.msra.mxu0 0.0
      %700 = vmatprep.subr.mxu0 0.0
      %701 = vmatpush1.xpose.msra.mxu0 0.0
      %702 = vmatprep.subr.mxu0 0.0
      %703 = vmatpush1.xpose.msra.mxu0 0.0
      %704 = vmatprep.subr.mxu0 0.0
      %705 = vmatpush1.xpose.msra.mxu0 0.0
      %706 = vmatprep.subr.mxu0 0.0
      %707 = vmatpush1.xpose.msra.mxu0 0.0
      %708 = vmatprep.subr.mxu0 0.0
      %709 = vmatpush1.xpose.msra.mxu0 0.0
      %710 = vmatprep.subr.mxu0 0.0
      %711 = vmatpush1.xpose.msra.mxu0 0.0
      %712 = vmatprep.subr.mxu0 0.0
      %713 = vmatpush1.xpose.msra.mxu0 0.0
      %714 = vmatprep.subr.mxu0 0.0
      %715 = vmatpush1.xpose.msra.mxu0 0.0
      %716 = vmatprep.subr.mxu0 0.0
      %717 = vmatpush1.xpose.msra.mxu0 0.0
      %718 = vmatprep.subr.mxu0 0.0
      %719 = vmatpush1.xpose.msra.mxu0 0.0
      %720 = vmatprep.subr.mxu0 0.0
      %721 = vmatpush1.xpose.msra.mxu0 0.0
      %722 = vmatprep.subr.mxu0 0.0
      %723 = vmatpush1.xpose.msra.mxu0 0.0
      %724 = vmatprep.subr.mxu0 0.0
      %725 = vmatpush1.xpose.msra.mxu0 0.0
      %726 = vmatprep.subr.mxu0 0.0
      %727 = vmatpush1.xpose.msra.mxu0 0.0
      %728 = vmatprep.subr.mxu0 0.0
      %729 = vmatpush1.xpose.msra.mxu0 0.0
      %730 = vmatprep.subr.mxu0 0.0
      %731 = vmatpush1.xpose.msra.mxu0 0.0
      %732 = vmatprep.subr.mxu0 0.0
      %733 = vmatpush1.xpose.msra.mxu0 0.0
      %734 = vmatprep.subr.mxu0 0.0
      %735 = vmatpush1.xpose.msra.mxu0 0.0
      %736 = vmatprep.subr.mxu0 0.0
      %737 = vmatpush1.xpose.msra.mxu0 0.0
      %738 = vmatprep.mubr.f32.mxu0 0.0
      %739 = vmatmul.mubr.f32.gmra.mrb[0].mxu0 %v669
      %v740 = vpop.f32.mrb[0].mxu0
      %v741 = vadd.f32 0.0, %v740
      %v742 = vpop.f32.mrb[0].mxu0
      %743 = vdwg.mxu0
      %v745 = vsel %vm562, %v582, 0
      %v748 = vsel %vm562, %v586, 0
      %750 = vmatprep.subr.mxu0 0.0
      %751 = vmatpush1.xpose.msra.mxu0 %v748
      %752 = vmatprep.subr.mxu0 0.0
      %753 = vmatpush1.xpose.msra.mxu0 0.0
      %754 = vmatprep.subr.mxu0 0.0
      %755 = vmatpush1.xpose.msra.mxu0 0.0
      %756 = vmatprep.subr.mxu0 0.0
      %757 = vmatpush1.xpose.msra.mxu0 0.0
      %758 = vmatprep.subr.mxu0 0.0
      %759 = vmatpush1.xpose.msra.mxu0 0.0
      %760 = vmatprep.subr.mxu0 0.0
      %761 = vmatpush1.xpose.msra.mxu0 0.0
      %762 = vmatprep.subr.mxu0 0.0
      %763 = vmatpush1.xpose.msra.mxu0 0.0
      %764 = vmatprep.subr.mxu0 0.0
      %765 = vmatpush1.xpose.msra.mxu0 0.0
      %766 = vmatprep.subr.mxu0 0.0
      %767 = vmatpush1.xpose.msra.mxu0 0.0
      %768 = vmatprep.subr.mxu0 0.0
      %769 = vmatpush1.xpose.msra.mxu0 0.0
      %770 = vmatprep.subr.mxu0 0.0
      %771 = vmatpush1.xpose.msra.mxu0 0.0
      %772 = vmatprep.subr.mxu0 0.0
      %773 = vmatpush1.xpose.msra.mxu0 0.0
      %774 = vmatprep.subr.mxu0 0.0
      %775 = vmatpush1.xpose.msra.mxu0 0.0
      %776 = vmatprep.subr.mxu0 0.0
      %777 = vmatpush1.xpose.msra.mxu0 0.0
      %778 = vmatprep.subr.mxu0 0.0
      %779 = vmatpush1.xpose.msra.mxu0 0.0
      %780 = vmatprep.subr.mxu0 0.0
      %781 = vmatpush1.xpose.msra.mxu0 0.0
      %782 = vmatprep.subr.mxu0 0.0
      %783 = vmatpush1.xpose.msra.mxu0 0.0
      %784 = vmatprep.subr.mxu0 0.0
      %785 = vmatpush1.xpose.msra.mxu0 0.0
      %786 = vmatprep.subr.mxu0 0.0
      %787 = vmatpush1.xpose.msra.mxu0 0.0
      %788 = vmatprep.subr.mxu0 0.0
      %789 = vmatpush1.xpose.msra.mxu0 0.0
      %790 = vmatprep.subr.mxu0 0.0
      %791 = vmatpush1.xpose.msra.mxu0 0.0
      %792 = vmatprep.subr.mxu0 0.0
      %793 = vmatpush1.xpose.msra.mxu0 0.0
      %794 = vmatprep.subr.mxu0 0.0
      %795 = vmatpush1.xpose.msra.mxu0 0.0
      %796 = vmatprep.subr.mxu0 0.0
      %797 = vmatpush1.xpose.msra.mxu0 0.0
      %798 = vmatprep.subr.mxu0 0.0
      %799 = vmatpush1.xpose.msra.mxu0 0.0
      %800 = vmatprep.subr.mxu0 0.0
      %801 = vmatpush1.xpose.msra.mxu0 0.0
      %802 = vmatprep.subr.mxu0 0.0
      %803 = vmatpush1.xpose.msra.mxu0 0.0
      %804 = vmatprep.subr.mxu0 0.0
      %805 = vmatpush1.xpose.msra.mxu0 0.0
      %806 = vmatprep.subr.mxu0 0.0
      %807 = vmatpush1.xpose.msra.mxu0 0.0
      %808 = vmatprep.subr.mxu0 0.0
      %809 = vmatpush1.xpose.msra.mxu0 0.0
      %810 = vmatprep.subr.mxu0 0.0
      %811 = vmatpush1.xpose.msra.mxu0 0.0
      %812 = vmatprep.subr.mxu0 0.0
      %813 = vmatpush1.xpose.msra.mxu0 0.0
      %814 = vmatprep.mubr.f32.mxu0 0.0
      %815 = vmatmul.mubr.f32.gmra.mrb[0].mxu0 %v745
      %v816 = vpop.f32.mrb[0].mxu0
      %v817 = vadd.f32 0.0, %v816
      %v818 = vpop.f32.mrb[0].mxu0
      %819 = vdwg.mxu0
      %v821 = vsel %vm562, %v583, 0
      %v824 = vsel %vm562, %v587, 0
      %826 = vmatprep.subr.mxu0 0.0
      %827 = vmatpush1.xpose.msra.mxu0 %v824
      %828 = vmatprep.subr.mxu0 0.0
      %829 = vmatpush1.xpose.msra.mxu0 0.0
      %830 = vmatprep.subr.mxu0 0.0
      %831 = vmatpush1.xpose.msra.mxu0 0.0
      %832 = vmatprep.subr.mxu0 0.0
      %833 = vmatpush1.xpose.msra.mxu0 0.0
      %834 = vmatprep.subr.mxu0 0.0
      %835 = vmatpush1.xpose.msra.mxu0 0.0
      %836 = vmatprep.subr.mxu0 0.0
      %837 = vmatpush1.xpose.msra.mxu0 0.0
      %838 = vmatprep.subr.mxu0 0.0
      %839 = vmatpush1.xpose.msra.mxu0 0.0
      %840 = vmatprep.subr.mxu0 0.0
      %841 = vmatpush1.xpose.msra.mxu0 0.0
      %842 = vmatprep.subr.mxu0 0.0
      %843 = vmatpush1.xpose.msra.mxu0 0.0
      %844 = vmatprep.subr.mxu0 0.0
      %845 = vmatpush1.xpose.msra.mxu0 0.0
      %846 = vmatprep.subr.mxu0 0.0
      %847 = vmatpush1.xpose.msra.mxu0 0.0
      %848 = vmatprep.subr.mxu0 0.0
      %849 = vmatpush1.xpose.msra.mxu0 0.0
      %850 = vmatprep.subr.mxu0 0.0
      %851 = vmatpush1.xpose.msra.mxu0 0.0
      %852 = vmatprep.subr.mxu0 0.0
      %853 = vmatpush1.xpose.msra.mxu0 0.0
      %854 = vmatprep.subr.mxu0 0.0
      %855 = vmatpush1.xpose.msra.mxu0 0.0
      %856 = vmatprep.subr.mxu0 0.0
      %857 = vmatpush1.xpose.msra.mxu0 0.0
      %858 = vmatprep.subr.mxu0 0.0
      %859 = vmatpush1.xpose.msra.mxu0 0.0
      %860 = vmatprep.subr.mxu0 0.0
      %861 = vmatpush1.xpose.msra.mxu0 0.0
      %862 = vmatprep.subr.mxu0 0.0
      %863 = vmatpush1.xpose.msra.mxu0 0.0
      %864 = vmatprep.subr.mxu0 0.0
      %865 = vmatpush1.xpose.msra.mxu0 0.0
      %866 = vmatprep.subr.mxu0 0.0
      %867 = vmatpush1.xpose.msra.mxu0 0.0
      %868 = vmatprep.subr.mxu0 0.0
      %869 = vmatpush1.xpose.msra.mxu0 0.0
      %870 = vmatprep.subr.mxu0 0.0
      %871 = vmatpush1.xpose.msra.mxu0 0.0
      %872 = vmatprep.subr.mxu0 0.0
      %873 = vmatpush1.xpose.msra.mxu0 0.0
      %874 = vmatprep.subr.mxu0 0.0
      %875 = vmatpush1.xpose.msra.mxu0 0.0
      %876 = vmatprep.subr.mxu0 0.0
      %877 = vmatpush1.xpose.msra.mxu0 0.0
      %878 = vmatprep.subr.mxu0 0.0
      %879 = vmatpush1.xpose.msra.mxu0 0.0
      %880 = vmatprep.subr.mxu0 0.0
      %881 = vmatpush1.xpose.msra.mxu0 0.0
      %882 = vmatprep.subr.mxu0 0.0
      %883 = vmatpush1.xpose.msra.mxu0 0.0
      %884 = vmatprep.subr.mxu0 0.0
      %885 = vmatpush1.xpose.msra.mxu0 0.0
      %886 = vmatprep.subr.mxu0 0.0
      %887 = vmatpush1.xpose.msra.mxu0 0.0
      %888 = vmatprep.subr.mxu0 0.0
      %889 = vmatpush1.xpose.msra.mxu0 0.0
      %890 = vmatprep.mubr.f32.mxu0 0.0
      %891 = vmatmul.mubr.f32.gmra.mrb[0].mxu0 %v821
      %v892 = vpop.f32.mrb[0].mxu0
      %v893 = vadd.f32 0.0, %v892
      %v894 = vpop.f32.mrb[0].mxu0
      %895 = vdwg.mxu0
      %v896 = vsel %vm562, %v665, -inf
      %897 = vmax.xlane.f32.xlu0 %v896
      %v898 = vpop.xlane.xlu0 %897
      %v899 = vsel %vm562, %v741, -inf
      %900 = vmax.xlane.f32.xlu0 %v899
      %v901 = vpop.xlane.xlu0 %900
      %v902 = vsel %vm562, %v817, -inf
      %903 = vmax.xlane.f32.xlu0 %v902
      %v904 = vpop.xlane.xlu0 %903
      %v905 = vsel %vm562, %v893, -inf
      %906 = vmax.xlane.f32.xlu0 %v905
      %v907 = vpop.xlane.xlu0 %906
      %v908 = vsub.f32 %v665, %v898
      %v909 = vsub.f32 %v741, %v901
      %v910 = vsub.f32 %v817, %v904
      %v911 = vsub.f32 %v893, %v907
      %v912 = vmul.f32 %v908, 1.442695
      %v913 = vpow.pop %v912
      %v914 = vmul.f32 %v909, 1.442695
      %v915 = vpow.pop %v914
      %v916 = vmul.f32 %v910, 1.442695
      %v917 = vpow.pop %v916
      %v918 = vmul.f32 %v911, 1.442695
      %v919 = vpow.pop %v918
      %v920 = vsel %vm562, %v913, 0.0
      %921 = vadd.xlane.f32.xlu0 %v920
      %v922 = vpop.xlane.xlu0 %921
      %v923 = vsel %vm562, %v915, 0.0
      %924 = vadd.xlane.f32.xlu0 %v923
      %v925 = vpop.xlane.xlu0 %924
      %v926 = vsel %vm562, %v917, 0.0
      %927 = vadd.xlane.f32.xlu0 %v926
      %v928 = vpop.xlane.xlu0 %927
      %v929 = vsel %vm562, %v919, 0.0
      %930 = vadd.xlane.f32.xlu0 %v929
      %v931 = vpop.xlane.xlu0 %930
      %v932 = vrcp.pop %v922
      %v933 = vrcp.pop %v925
      %v934 = vrcp.pop %v928
      %v935 = vrcp.pop %v931
      %v936 = vmul.f32 %v913, %v932
      %v937 = vmul.f32 %v915, %v933
      %v938 = vmul.f32 %v917, %v934
      %v939 = vmul.f32 %v919, %v935
      %v941 = vsel %vm562, %v936, 0
      %943 = vmatprep.subr.mxu0 0.0
      %944 = vmatpush1.msra.mxu0 %v588
      %945 = vmatprep.subr.mxu0 0.0
      %946 = vmatpush1.msra.mxu0 0.0
      %947 = vmatprep.subr.mxu0 0.0
      %948 = vmatpush1.msra.mxu0 0.0
      %949 = vmatprep.subr.mxu0 0.0
      %950 = vmatpush1.msra.mxu0 0.0
      %951 = vmatprep.subr.mxu0 0.0
      %952 = vmatpush1.msra.mxu0 0.0
      %953 = vmatprep.subr.mxu0 0.0
      %954 = vmatpush1.msra.mxu0 0.0
      %955 = vmatprep.subr.mxu0 0.0
      %956 = vmatpush1.msra.mxu0 0.0
      %957 = vmatprep.subr.mxu0 0.0
      %958 = vmatpush1.msra.mxu0 0.0
      %959 = vmatprep.subr.mxu0 0.0
      %960 = vmatpush1.msra.mxu0 0.0
      %961 = vmatprep.subr.mxu0 0.0
      %962 = vmatpush1.msra.mxu0 0.0
      %963 = vmatprep.subr.mxu0 0.0
      %964 = vmatpush1.msra.mxu0 0.0
      %965 = vmatprep.subr.mxu0 0.0
      %966 = vmatpush1.msra.mxu0 0.0
      %967 = vmatprep.subr.mxu0 0.0
      %968 = vmatpush1.msra.mxu0 0.0
      %969 = vmatprep.subr.mxu0 0.0
      %970 = vmatpush1.msra.mxu0 0.0
      %971 = vmatprep.subr.mxu0 0.0
      %972 = vmatpush1.msra.mxu0 0.0
      %973 = vmatprep.subr.mxu0 0.0
      %974 = vmatpush1.msra.mxu0 0.0
      %975 = vmatprep.subr.mxu0 0.0
      %976 = vmatpush1.msra.mxu0 0.0
      %977 = vmatprep.subr.mxu0 0.0
      %978 = vmatpush1.msra.mxu0 0.0
      %979 = vmatprep.subr.mxu0 0.0
      %980 = vmatpush1.msra.mxu0 0.0
      %981 = vmatprep.subr.mxu0 0.0
      %982 = vmatpush1.msra.mxu0 0.0
      %983 = vmatprep.subr.mxu0 0.0
      %984 = vmatpush1.msra.mxu0 0.0
      %985 = vmatprep.subr.mxu0 0.0
      %986 = vmatpush1.msra.mxu0 0.0
      %987 = vmatprep.subr.mxu0 0.0
      %988 = vmatpush1.msra.mxu0 0.0
      %989 = vmatprep.subr.mxu0 0.0
      %990 = vmatpush1.msra.mxu0 0.0
      %991 = vmatprep.subr.mxu0 0.0
      %992 = vmatpush1.msra.mxu0 0.0
      %993 = vmatprep.subr.mxu0 0.0
      %994 = vmatpush1.msra.mxu0 0.0
      %995 = vmatprep.subr.mxu0 0.0
      %996 = vmatpush1.msra.mxu0 0.0
      %997 = vmatprep.subr.mxu0 0.0
      %998 = vmatpush1.msra.mxu0 0.0
      %999 = vmatprep.subr.mxu0 0.0
      %1000 = vmatpush1.msra.mxu0 0.0
      %1001 = vmatprep.subr.mxu0 0.0
      %1002 = vmatpush1.msra.mxu0 0.0
      %1003 = vmatprep.subr.mxu0 0.0
      %1004 = vmatpush1.msra.mxu0 0.0
      %1005 = vmatprep.subr.mxu0 0.0
      %1006 = vmatpush1.msra.mxu0 0.0
      %1007 = vmatprep.mubr.f32.mxu0 0.0
      %1008 = vmatmul.mubr.f32.gmra.mrb[0].mxu0 %v941
      %v1009 = vpop.f32.mrb[0].mxu0
      %v1010 = vadd.f32 0.0, %v1009
      %v1011 = vpop.f32.mrb[0].mxu0
      %1012 = vdwg.mxu0
      %v1014 = vsel %vm562, %v937, 0
      %1016 = vmatprep.subr.mxu0 0.0
      %1017 = vmatpush1.msra.mxu0 %v589
      %1018 = vmatprep.subr.mxu0 0.0
      %1019 = vmatpush1.msra.mxu0 0.0
      %1020 = vmatprep.subr.mxu0 0.0
      %1021 = vmatpush1.msra.mxu0 0.0
      %1022 = vmatprep.subr.mxu0 0.0
      %1023 = vmatpush1.msra.mxu0 0.0
      %1024 = vmatprep.subr.mxu0 0.0
      %1025 = vmatpush1.msra.mxu0 0.0
      %1026 = vmatprep.subr.mxu0 0.0
      %1027 = vmatpush1.msra.mxu0 0.0
      %1028 = vmatprep.subr.mxu0 0.0
      %1029 = vmatpush1.msra.mxu0 0.0
      %1030 = vmatprep.subr.mxu0 0.0
      %1031 = vmatpush1.msra.mxu0 0.0
      %1032 = vmatprep.subr.mxu0 0.0
      %1033 = vmatpush1.msra.mxu0 0.0
      %1034 = vmatprep.subr.mxu0 0.0
      %1035 = vmatpush1.msra.mxu0 0.0
      %1036 = vmatprep.subr.mxu0 0.0
      %1037 = vmatpush1.msra.mxu0 0.0
      %1038 = vmatprep.subr.mxu0 0.0
      %1039 = vmatpush1.msra.mxu0 0.0
      %1040 = vmatprep.subr.mxu0 0.0
      %1041 = vmatpush1.msra.mxu0 0.0
      %1042 = vmatprep.subr.mxu0 0.0
      %1043 = vmatpush1.msra.mxu0 0.0
      %1044 = vmatprep.subr.mxu0 0.0
      %1045 = vmatpush1.msra.mxu0 0.0
      %1046 = vmatprep.subr.mxu0 0.0
      %1047 = vmatpush1.msra.mxu0 0.0
      %1048 = vmatprep.subr.mxu0 0.0
      %1049 = vmatpush1.msra.mxu0 0.0
      %1050 = vmatprep.subr.mxu0 0.0
      %1051 = vmatpush1.msra.mxu0 0.0
      %1052 = vmatprep.subr.mxu0 0.0
      %1053 = vmatpush1.msra.mxu0 0.0
      %1054 = vmatprep.subr.mxu0 0.0
      %1055 = vmatpush1.msra.mxu0 0.0
      %1056 = vmatprep.subr.mxu0 0.0
      %1057 = vmatpush1.msra.mxu0 0.0
      %1058 = vmatprep.subr.mxu0 0.0
      %1059 = vmatpush1.msra.mxu0 0.0
      %1060 = vmatprep.subr.mxu0 0.0
      %1061 = vmatpush1.msra.mxu0 0.0
      %1062 = vmatprep.subr.mxu0 0.0
      %1063 = vmatpush1.msra.mxu0 0.0
      %1064 = vmatprep.subr.mxu0 0.0
      %1065 = vmatpush1.msra.mxu0 0.0
      %1066 = vmatprep.subr.mxu0 0.0
      %1067 = vmatpush1.msra.mxu0 0.0
      %1068 = vmatprep.subr.mxu0 0.0
      %1069 = vmatpush1.msra.mxu0 0.0
      %1070 = vmatprep.subr.mxu0 0.0
      %1071 = vmatpush1.msra.mxu0 0.0
      %1072 = vmatprep.subr.mxu0 0.0
      %1073 = vmatpush1.msra.mxu0 0.0
      %1074 = vmatprep.subr.mxu0 0.0
      %1075 = vmatpush1.msra.mxu0 0.0
      %1076 = vmatprep.subr.mxu0 0.0
      %1077 = vmatpush1.msra.mxu0 0.0
      %1078 = vmatprep.subr.mxu0 0.0
      %1079 = vmatpush1.msra.mxu0 0.0
      %1080 = vmatprep.mubr.f32.mxu0 0.0
      %1081 = vmatmul.mubr.f32.gmra.mrb[0].mxu0 %v1014
      %v1082 = vpop.f32.mrb[0].mxu0
      %v1083 = vadd.f32 0.0, %v1082
      %v1084 = vpop.f32.mrb[0].mxu0
      %1085 = vdwg.mxu0
      %v1087 = vsel %vm562, %v938, 0
      %1089 = vmatprep.subr.mxu0 0.0
      %1090 = vmatpush1.msra.mxu0 %v590
      %1091 = vmatprep.subr.mxu0 0.0
      %1092 = vmatpush1.msra.mxu0 0.0
      %1093 = vmatprep.subr.mxu0 0.0
      %1094 = vmatpush1.msra.mxu0 0.0
      %1095 = vmatprep.subr.mxu0 0.0
      %1096 = vmatpush1.msra.mxu0 0.0
      %1097 = vmatprep.subr.mxu0 0.0
      %1098 = vmatpush1.msra.mxu0 0.0
      %1099 = vmatprep.subr.mxu0 0.0
      %1100 = vmatpush1.msra.mxu0 0.0
      %1101 = vmatprep.subr.mxu0 0.0
      %1102 = vmatpush1.msra.mxu0 0.0
      %1103 = vmatprep.subr.mxu0 0.0
      %1104 = vmatpush1.msra.mxu0 0.0
      %1105 = vmatprep.subr.mxu0 0.0
      %1106 = vmatpush1.msra.mxu0 0.0
      %1107 = vmatprep.subr.mxu0 0.0
      %1108 = vmatpush1.msra.mxu0 0.0
      %1109 = vmatprep.subr.mxu0 0.0
      %1110 = vmatpush1.msra.mxu0 0.0
      %1111 = vmatprep.subr.mxu0 0.0
      %1112 = vmatpush1.msra.mxu0 0.0
      %1113 = vmatprep.subr.mxu0 0.0
      %1114 = vmatpush1.msra.mxu0 0.0
      %1115 = vmatprep.subr.mxu0 0.0
      %1116 = vmatpush1.msra.mxu0 0.0
      %1117 = vmatprep.subr.mxu0 0.0
      %1118 = vmatpush1.msra.mxu0 0.0
      %1119 = vmatprep.subr.mxu0 0.0
      %1120 = vmatpush1.msra.mxu0 0.0
      %1121 = vmatprep.subr.mxu0 0.0
      %1122 = vmatpush1.msra.mxu0 0.0
      %1123 = vmatprep.subr.mxu0 0.0
      %1124 = vmatpush1.msra.mxu0 0.0
      %1125 = vmatprep.subr.mxu0 0.0
      %1126 = vmatpush1.msra.mxu0 0.0
      %1127 = vmatprep.subr.mxu0 0.0
      %1128 = vmatpush1.msra.mxu0 0.0
      %1129 = vmatprep.subr.mxu0 0.0
      %1130 = vmatpush1.msra.mxu0 0.0
      %1131 = vmatprep.subr.mxu0 0.0
      %1132 = vmatpush1.msra.mxu0 0.0
      %1133 = vmatprep.subr.mxu0 0.0
      %1134 = vmatpush1.msra.mxu0 0.0
      %1135 = vmatprep.subr.mxu0 0.0
      %1136 = vmatpush1.msra.mxu0 0.0
      %1137 = vmatprep.subr.mxu0 0.0
      %1138 = vmatpush1.msra.mxu0 0.0
      %1139 = vmatprep.subr.mxu0 0.0
      %1140 = vmatpush1.msra.mxu0 0.0
      %1141 = vmatprep.subr.mxu0 0.0
      %1142 = vmatpush1.msra.mxu0 0.0
      %1143 = vmatprep.subr.mxu0 0.0
      %1144 = vmatpush1.msra.mxu0 0.0
      %1145 = vmatprep.subr.mxu0 0.0
      %1146 = vmatpush1.msra.mxu0 0.0
      %1147 = vmatprep.subr.mxu0 0.0
      %1148 = vmatpush1.msra.mxu0 0.0
      %1149 = vmatprep.subr.mxu0 0.0
      %1150 = vmatpush1.msra.mxu0 0.0
      %1151 = vmatprep.subr.mxu0 0.0
      %1152 = vmatpush1.msra.mxu0 0.0
      %1153 = vmatprep.mubr.f32.mxu0 0.0
      %1154 = vmatmul.mubr.f32.gmra.mrb[0].mxu0 %v1087
      %v1155 = vpop.f32.mrb[0].mxu0
      %v1156 = vadd.f32 0.0, %v1155
      %v1157 = vpop.f32.mrb[0].mxu0
      %1158 = vdwg.mxu0
      %v1160 = vsel %vm562, %v939, 0
      %1162 = vmatprep.subr.mxu0 0.0
      %1163 = vmatpush1.msra.mxu0 %v591
      %1164 = vmatprep.subr.mxu0 0.0
      %1165 = vmatpush1.msra.mxu0 0.0
      %1166 = vmatprep.subr.mxu0 0.0
      %1167 = vmatpush1.msra.mxu0 0.0
      %1168 = vmatprep.subr.mxu0 0.0
      %1169 = vmatpush1.msra.mxu0 0.0
      %1170 = vmatprep.subr.mxu0 0.0
      %1171 = vmatpush1.msra.mxu0 0.0
      %1172 = vmatprep.subr.mxu0 0.0
      %1173 = vmatpush1.msra.mxu0 0.0
      %1174 = vmatprep.subr.mxu0 0.0
      %1175 = vmatpush1.msra.mxu0 0.0
      %1176 = vmatprep.subr.mxu0 0.0
      %1177 = vmatpush1.msra.mxu0 0.0
      %1178 = vmatprep.subr.mxu0 0.0
      %1179 = vmatpush1.msra.mxu0 0.0
      %1180 = vmatprep.subr.mxu0 0.0
      %1181 = vmatpush1.msra.mxu0 0.0
      %1182 = vmatprep.subr.mxu0 0.0
      %1183 = vmatpush1.msra.mxu0 0.0
      %1184 = vmatprep.subr.mxu0 0.0
      %1185 = vmatpush1.msra.mxu0 0.0
      %1186 = vmatprep.subr.mxu0 0.0
      %1187 = vmatpush1.msra.mxu0 0.0
      %1188 = vmatprep.subr.mxu0 0.0
      %1189 = vmatpush1.msra.mxu0 0.0
      %1190 = vmatprep.subr.mxu0 0.0
      %1191 = vmatpush1.msra.mxu0 0.0
      %1192 = vmatprep.subr.mxu0 0.0
      %1193 = vmatpush1.msra.mxu0 0.0
      %1194 = vmatprep.subr.mxu0 0.0
      %1195 = vmatpush1.msra.mxu0 0.0
      %1196 = vmatprep.subr.mxu0 0.0
      %1197 = vmatpush1.msra.mxu0 0.0
      %1198 = vmatprep.subr.mxu0 0.0
      %1199 = vmatpush1.msra.mxu0 0.0
      %1200 = vmatprep.subr.mxu0 0.0
      %1201 = vmatpush1.msra.mxu0 0.0
      %1202 = vmatprep.subr.mxu0 0.0
      %1203 = vmatpush1.msra.mxu0 0.0
      %1204 = vmatprep.subr.mxu0 0.0
      %1205 = vmatpush1.msra.mxu0 0.0
      %1206 = vmatprep.subr.mxu0 0.0
      %1207 = vmatpush1.msra.mxu0 0.0
      %1208 = vmatprep.subr.mxu0 0.0
      %1209 = vmatpush1.msra.mxu0 0.0
      %1210 = vmatprep.subr.mxu0 0.0
      %1211 = vmatpush1.msra.mxu0 0.0
      %1212 = vmatprep.subr.mxu0 0.0
      %1213 = vmatpush1.msra.mxu0 0.0
      %1214 = vmatprep.subr.mxu0 0.0
      %1215 = vmatpush1.msra.mxu0 0.0
      %1216 = vmatprep.subr.mxu0 0.0
      %1217 = vmatpush1.msra.mxu0 0.0
      %1218 = vmatprep.subr.mxu0 0.0
      %1219 = vmatpush1.msra.mxu0 0.0
      %1220 = vmatprep.subr.mxu0 0.0
      %1221 = vmatpush1.msra.mxu0 0.0
      %1222 = vmatprep.subr.mxu0 0.0
      %1223 = vmatpush1.msra.mxu0 0.0
      %1224 = vmatprep.subr.mxu0 0.0
      %1225 = vmatpush1.msra.mxu0 0.0
      %1226 = vmatprep.mubr.f32.mxu0 0.0
      %1227 = vmatmul.mubr.f32.gmra.mrb[0].mxu0 %v1160
      %v1228 = vpop.f32.mrb[0].mxu0
      %v1229 = vadd.f32 0.0, %v1228
      %v1230 = vpop.f32.mrb[0].mxu0
      %1231 = vdwg.mxu0
      %1232 = vst.msk [vmem:[#allocation5] sm:$0xff] %vm562, %v1010
      %1234 = vrot.lane.b32.xlu0 %v1083, 8
      %v1235 = vpop.permute.xlu0 %1234
      %vm1237 = vcmask 130112
      %1238 = vst.msk [vmem:[#allocation5] sm:$0xff] %vm1237, %v1235
      %1240 = vrot.lane.b32.xlu0 %v1156, 16
      %v1241 = vpop.permute.xlu0 %1240
      %vm1243 = vcmask 195712
      %1244 = vst.msk [vmem:[#allocation5] sm:$0xff] %vm1243, %v1241
      %1246 = vrot.lane.b32.xlu0 %v1229, 24
      %v1247 = vpop.permute.xlu0 %1246
      %vm1249 = vcmask 261312
      %1250 = vst.msk [vmem:[#allocation5] sm:$0xff] %vm1249, %v1247
      %v1251 = vld [vmem:[#allocation5] sm:$0xff]
      %v1252 = vld [vmem:[%s6] sm:$0xff]
      %v1253 = vld [vmem:[%s6 + $0x8] sm:$0xff]
      %v1254 = vld [vmem:[%s6 + $0x10] sm:$0xff]
      %v1255 = vld [vmem:[%s6 + $0x18] sm:$0xff]
      %v1256 = vld [vmem:[%s7] sm:$0x1]
      %v1258 = vlaneseq
      %v1259 = vshrl.u32 %v1258, 7
      %v1260 = vsub.s32 0, %v1259
      %v1261 = vrot.slane %v1256, %v1260
      %v1264 = vsel %vm488, %v1251, 0
      %1266 = vmatprep.subr.mxu0 0.0
      %1267 = vmatpush1.msra.mxu0 %v1252
      %1268 = vmatprep.subr.mxu0 0.0
      %1269 = vmatpush1.msra.mxu0 %v1253
      %1270 = vmatprep.subr.mxu0 0.0
      %1271 = vmatpush1.msra.mxu0 %v1254
      %1272 = vmatprep.subr.mxu0 0.0
      %1273 = vmatpush1.msra.mxu0 %v1255
      %1274 = vmatprep.subr.mxu0 0.0
      %1275 = vmatpush1.msra.mxu0 0.0
      %1276 = vmatprep.subr.mxu0 0.0
      %1277 = vmatpush1.msra.mxu0 0.0
      %1278 = vmatprep.subr.mxu0 0.0
      %1279 = vmatpush1.msra.mxu0 0.0
      %1280 = vmatprep.subr.mxu0 0.0
      %1281 = vmatpush1.msra.mxu0 0.0
      %1282 = vmatprep.subr.mxu0 0.0
      %1283 = vmatpush1.msra.mxu0 0.0
      %1284 = vmatprep.subr.mxu0 0.0
      %1285 = vmatpush1.msra.mxu0 0.0
      %1286 = vmatprep.subr.mxu0 0.0
      %1287 = vmatpush1.msra.mxu0 0.0
      %1288 = vmatprep.subr.mxu0 0.0
      %1289 = vmatpush1.msra.mxu0 0.0
      %1290 = vmatprep.subr.mxu0 0.0
      %1291 = vmatpush1.msra.mxu0 0.0
      %1292 = vmatprep.subr.mxu0 0.0
      %1293 = vmatpush1.msra.mxu0 0.0
      %1294 = vmatprep.subr.mxu0 0.0
      %1295 = vmatpush1.msra.mxu0 0.0
      %1296 = vmatprep.subr.mxu0 0.0
      %1297 = vmatpush1.msra.mxu0 0.0
      %1298 = vmatprep.subr.mxu0 0.0
      %1299 = vmatpush1.msra.mxu0 0.0
      %1300 = vmatprep.subr.mxu0 0.0
      %1301 = vmatpush1.msra.mxu0 0.0
      %1302 = vmatprep.subr.mxu0 0.0
      %1303 = vmatpush1.msra.mxu0 0.0
      %1304 = vmatprep.subr.mxu0 0.0
      %1305 = vmatpush1.msra.mxu0 0.0
      %1306 = vmatprep.subr.mxu0 0.0
      %1307 = vmatpush1.msra.mxu0 0.0
      %1308 = vmatprep.subr.mxu0 0.0
      %1309 = vmatpush1.msra.mxu0 0.0
      %1310 = vmatprep.subr.mxu0 0.0
      %1311 = vmatpush1.msra.mxu0 0.0
      %1312 = vmatprep.subr.mxu0 0.0
      %1313 = vmatpush1.msra.mxu0 0.0
      %1314 = vmatprep.subr.mxu0 0.0
      %1315 = vmatpush1.msra.mxu0 0.0
      %1316 = vmatprep.subr.mxu0 0.0
      %1317 = vmatpush1.msra.mxu0 0.0
      %1318 = vmatprep.subr.mxu0 0.0
      %1319 = vmatpush1.msra.mxu0 0.0
      %1320 = vmatprep.subr.mxu0 0.0
      %1321 = vmatpush1.msra.mxu0 0.0
      %1322 = vmatprep.subr.mxu0 0.0
      %1323 = vmatpush1.msra.mxu0 0.0
      %1324 = vmatprep.subr.mxu0 0.0
      %1325 = vmatpush1.msra.mxu0 0.0
      %1326 = vmatprep.subr.mxu0 0.0
      %1327 = vmatpush1.msra.mxu0 0.0
      %1328 = vmatprep.subr.mxu0 0.0
      %1329 = vmatpush1.msra.mxu0 0.0
      %1330 = vmatprep.mubr.f32.mxu0 0.0
      %1331 = vmatmul.mubr.f32.gmra.mrb[0].mxu0 %v1264
      %v1332 = vpop.f32.mrb[0].mxu0
      %v1333 = vadd.f32 %v1261, %v1332
      %v1334 = vpop.f32.mrb[0].mxu0
      %1335 = vdwg.mxu0
      %1336 = vst.msk [vmem:[%s348] sm:$0xff] %vm488, %v1333
      %p1337 = scmp.lt.s32.totalorder %s23, 1
      %s1338 = scalar_select %p1337, %s23, 1
      %p1339 = scmp.lt.s32.totalorder %s24, 0
      %s1340 = scalar_select %p1339, %s24, 0
      %s1341 = sadd.s32 %s1340, %s1338
      %s1342 = smul.addr %s1341, 8
      %s1343 = scalar_lea.vmem %s8, %s1342
      // Predicated region
      $region57: #{attention_forward.1} parent=51 // pred_check
        %p1344 = pneg %p231
      $region58: #{attention_forward.1} parent=51 // pred_check_branch
        %1346 = sbr.rel (%p1344) target = $region60
      $region59: #{attention_forward.1} parent=51 // pred_region
        _
      $region60: #{attention_forward.1} parent=51 // pred_fallthru
        _
    $region52: #{attention_forward.1} parent=5 // pred_fallthru
      _
    %p1347 = scmp.le.s32.totalorder 2, %s14
    // Predicated region
    $region61: #{attention_forward.1} parent=5 // pred_check
      %p1348 = pneg %p1347
    $region62: #{attention_forward.1} parent=5 // pred_check_branch
      %1350 = sbr.rel (%p1348) target = $region64
    $region63: #{attention_forward.1} parent=5 // pred_region
      %s1351 = ssub.s32 %s14, 2
      // Predicated region
      $region65: #{attention_forward.1} parent=63 // pred_check
        %p1352 = pneg %p237
      $region66: #{attention_forward.1} parent=63 // pred_check_branch
        %1354 = sbr.rel (%p1352) target = $region68
      $region67: #{attention_forward.1} parent=63 // pred_region
        %p1355 = scmp.lt.s32.totalorder %s25, 1
        %s1356 = scalar_select %p1355, %s25, 1
        %p1357 = scmp.lt.s32.totalorder %s26, 0
        %s1358 = scalar_select %p1357, %s26, 0
        %s1359 = sadd.s32 %s1358, %s1356
        %s1360 = smul.addr %s1359, 8
        %s1361 = scalar_lea.vmem %s8, %s1360
      $region68: #{attention_forward.1} parent=63 // pred_fallthru
        _
    $region64: #{attention_forward.1} parent=5 // pred_fallthru
      _
  $region6: #{attention_forward.1} parent=0 // loop_footer
    %s18 = sadd.s32 1, %s14
  $region7: #{attention_forward.1} parent=0 // loop_footer_branch
    %13 = sbr.rel target = $region3
  $region8: #{attention_forward.1} parent=0 // loop_exit
    _

</llo_original>
